<compile_context>
chip_gen: v6e
topology: v6e:2x2x1
jax: 0.10.0
libtpu: 0.0.40
codegen_flags: <defaults>
</compile_context>

<pallas_src>
import functools

import jax
import jax.numpy as jnp
from jax.experimental import pallas as pl
from jax.experimental.pallas import tpu as pltpu


def cspa_kernel(x_ref, w1_ref, w2_ref, shift_ref,
                selh_ref, selw_ref, selc_ref, eh_ref, ew_ref,
                o_ref, *, H, W):
    """One grid step processes a (Bt, C, H*W) lane-dense slab, fully batched."""
    Bt, C, HW = x_ref.shape
    R = Bt * C                     # slab rows (sublanes)

    # Read the slab once and reuse it for pooling and gating.
    # (If inputs become bf16, this single upcast is the only full-slab cast.)
    xf = x_ref[...].astype(jnp.float32).reshape(R, HW)

    # ---- sliding-window max trees (XLU rolls + VPU max), whole slab ---------
    def window_max(v, length, stride):
        # u[:, j] = max_{k in [0, length)} v[:, j - k*stride]  (circular; only
        # non-wrapping positions are selected afterwards)
        cur, u = 1, v
        while cur < length:
            step = min(cur, length - cur)
            u = jnp.maximum(u, pltpu.roll(u, shift=step * stride, axis=1))
            cur += step
        return u

    tw = window_max(xf, W, 1)      # tw[:, h*W + W-1] = max over w of x[.., h, w]
    th = window_max(xf, H, W)      # th[:, (H-1)*W + w] = max over h of x[.., h, w]

    # ---- grouped pooled matrix (R, H+W+1) via 0/1 selection matmuls (MXU) ---
    # columns: [0..H) = max-over-W pool, [H..H+W) = max-over-H pool, [H+W] = mean
    pooled = (jnp.dot(tw, selh_ref[...], preferred_element_type=jnp.float32)
              + jnp.dot(th, selw_ref[...], preferred_element_type=jnp.float32)
              + jnp.dot(xf, selc_ref[...], preferred_element_type=jnp.float32))

    # ---- shared bottleneck for all pools & batches at once ------------------
    # 1x1 conv (BN scale folded in) -> +shift -> ReLU -> 1x1 conv -> sigmoid.
    # Weights are block-diagonal (one w1/w2 block per batch in the slab).
    h1 = jnp.dot(w1_ref[...], pooled, preferred_element_type=jnp.float32)
    h1 = jnp.maximum(h1 + shift_ref[...], 0.0)
    a = jax.nn.sigmoid(
        jnp.dot(w2_ref[...], h1, preferred_element_type=jnp.float32))  # (R, H+W+1)

    # ---- gating: out = x * repeat(a_h*a_c, W) * tile(a_w, H) ---------------
    a_h = a[:, :H]                           # (R, H)
    a_w = a[:, H:H + W]                      # (R, W)
    a_c = a[:, H + W:H + W + 1]              # (R, 1)
    ghc = a_h * a_c                          # tiny multiply, lane-broadcast

    exp_hc = jnp.dot(ghc, eh_ref[...], preferred_element_type=jnp.float32)  # (R, HW)
    exp_w = jnp.dot(a_w, ew_ref[...], preferred_element_type=jnp.float32)   # (R, HW)

    y = xf * exp_hc * exp_w                  # two lane-dense slab multiplies
    o_ref[...] = y.reshape(Bt, C, HW).astype(o_ref.dtype)


def _pick_block_b(B, per_batch_bytes):
    """VMEM-aware batch-block size + scoped VMEM limit.

    Accounts for double-buffered input+output blocks (4x) plus ~4x f32
    slab-sized intermediates (~8x total), and targets ~2 MiB of x per grid
    step to amortize per-step overhead.  Tiny B is kept in a single step
    (splitting it just pays the step overhead twice on single-core chips).
    """
    try:
        vmem_cap = int(pltpu.get_tpu_info().vmem_capacity_bytes)
    except Exception:
        vmem_cap = 64 << 20                      # conservative (v7x per-core)
    vmem_limit = min(vmem_cap // 2, 64 << 20)    # scoped limit we request
    budget = vmem_limit // 2                     # headroom for weights/consts

    max_by_vmem = max(1, budget // (8 * max(per_batch_bytes, 1)))
    target = max(1, (2 << 20) // max(per_batch_bytes, 1))
    bt = max(1, min(B, max_by_vmem, target))
    while B % bt:                                # keep blocks uniform
        bt -= 1
    return bt, vmem_limit


def cspa_pallas(x, w1, w2, bn_scale, bn_shift, *, block_b=None):
    B, C, H, W = x.shape
    Cr = w1.shape[0]
    HW = H * W
    Nn = H + W + 1

    per_batch_bytes = C * HW * jnp.dtype(x.dtype).itemsize
    auto_bt, vmem_limit = _pick_block_b(B, per_batch_bytes)
    if block_b is None:
        block_b = auto_bt
    assert B % block_b == 0, "block_b must divide B"
    grid = (B // block_b,)

    # ---- host-side (tiny) constant / weight preparation ---------------------
    # Fold eval-mode BN scale into conv1; build block-diagonal per-block weights.
    w1_folded = (bn_scale * w1).astype(jnp.float32)                       # (Cr, C)
    eye_b = jnp.eye(block_b, dtype=jnp.float32)
    w1_big = jnp.kron(eye_b, w1_folded)                                   # (bt*Cr, bt*C)
    w2_big = jnp.kron(eye_b, w2.astype(jnp.float32))                      # (bt*C, bt*Cr)
    shift_big = jnp.tile(bn_shift.astype(jnp.float32), (block_b, 1))      # (bt*Cr, 1)

    # Selection matrices (pooling) and expansion matrices (gating), all 0/1.
    j = jnp.arange(HW)
    selh = jnp.zeros((HW, Nn), jnp.float32).at[
        jnp.arange(H) * W + (W - 1), jnp.arange(H)].set(1.0)
    selw = jnp.zeros((HW, Nn), jnp.float32).at[
        (H - 1) * W + jnp.arange(W), H + jnp.arange(W)].set(1.0)
    selc = jnp.zeros((HW, Nn), jnp.float32).at[:, H + W].set(1.0 / HW)
    e_h = (j[None, :] // W == jnp.arange(H)[:, None]).astype(jnp.float32)  # (H, HW)
    e_w = (j[None, :] % W == jnp.arange(W)[:, None]).astype(jnp.float32)   # (W, HW)

    # Lane-dense presentation: last block axis is H*W.
    x_flat = x.reshape(B, C, HW)

    kernel = functools.partial(cspa_kernel, H=H, W=W)
    out_flat = pl.pallas_call(
        kernel,
        out_shape=jax.ShapeDtypeStruct((B, C, HW), x.dtype),
        grid_spec=pltpu.PrefetchScalarGridSpec(
            num_scalar_prefetch=0,
            grid=grid,
            in_specs=[
                pl.BlockSpec((block_b, C, HW), lambda i: (i, 0, 0)),
                pl.BlockSpec(w1_big.shape, lambda i: (0, 0)),
                pl.BlockSpec(w2_big.shape, lambda i: (0, 0)),
                pl.BlockSpec(shift_big.shape, lambda i: (0, 0)),
                pl.BlockSpec(selh.shape, lambda i: (0, 0)),
                pl.BlockSpec(selw.shape, lambda i: (0, 0)),
                pl.BlockSpec(selc.shape, lambda i: (0, 0)),
                pl.BlockSpec(e_h.shape, lambda i: (0, 0)),
                pl.BlockSpec(e_w.shape, lambda i: (0, 0)),
            ],
            out_specs=pl.BlockSpec((block_b, C, HW), lambda i: (i, 0, 0)),
        ),
        compiler_params=pltpu.CompilerParams(
            dimension_semantics=("parallel",),
            vmem_limit_bytes=int(vmem_limit),
        ),
    )(x_flat, w1_big, w2_big, shift_big, selh, selw, selc, e_h, e_w)
    return out_flat.reshape(B, C, H, W)


def cspa_reference(x, w1, w2, scale, shift):
    """Pure-JAX reference mirroring the PyTorch forward (BN in eval mode)."""
    x_h = jnp.max(x, axis=3)                    # (B, C, H)
    x_w = jnp.max(x, axis=2)                    # (B, C, W)
    x_c = jnp.mean(x, axis=(2, 3))[..., None]   # (B, C, 1)

    def fc(v):  # (B, C, N)
        h = jnp.einsum('rc,bcn->brn', w1, v)
        h = h * scale[None] + shift[None]
        h = jnp.maximum(h, 0.0)
        h = jnp.einsum('cr,brn->bcn', w2, h)
        return jax.nn.sigmoid(h)

    a_h = fc(x_h)
    a_w = fc(x_w)
    a_c = fc(x_c)
    return x * a_h[:, :, :, None] * a_w[:, :, None, :] * a_c[:, :, :, None]


if __name__ == "__main__":
    B, C, H, W = 2, 64, 16, 16
    reduction = 16
    Cr = C // reduction
    eps = 1e-5  # PyTorch BatchNorm2d default

    key = jax.random.PRNGKey(0)
    kx, kw1, kw2, kg, kb, km, kv = jax.random.split(key, 7)

    x = jax.random.normal(kx, (B, C, H, W), dtype=jnp.float32)

    # conv1: Conv2d(C, C//r, 1, bias=False)  -> weight (Cr, C)
    w1 = jax.random.normal(kw1, (Cr, C), dtype=jnp.float32) * 0.1
    # conv2: Conv2d(C//r, C, 1, bias=False)  -> weight (C, Cr)
    w2 = jax.random.normal(kw2, (C, Cr), dtype=jnp.float32) * 0.1

    # BatchNorm2d(Cr) parameters (deterministic synthetic values, eval mode)
    gamma = 1.0 + 0.1 * jax.random.normal(kg, (Cr,), dtype=jnp.float32)
    beta = 0.1 * jax.random.normal(kb, (Cr,), dtype=jnp.float32)
    running_mean = 0.1 * jax.random.normal(km, (Cr,), dtype=jnp.float32)
    running_var = jnp.abs(jax.random.normal(kv, (Cr,), dtype=jnp.float32)) + 0.5

    bn_scale = (gamma / jnp.sqrt(running_var + eps))[:, None]     # (Cr, 1)
    bn_shift = (beta - running_mean * bn_scale[:, 0])[:, None]    # (Cr, 1)

    ref = cspa_reference(x, w1, w2, bn_scale, bn_shift)

    # Auto-picked block (single grid step for this tiny B).
    out = cspa_pallas(x, w1, w2, bn_scale, bn_shift)
    out = jax.block_until_ready(out)
    assert out.shape == (B, C, H, W)
    assert jnp.allclose(out, ref, atol=1e-5, rtol=1e-5), (
        float(jnp.max(jnp.abs(out - ref))))

    # Also exercise the multi-step pipelined path (block_b=1 -> 2 grid steps).
    out2 = cspa_pallas(x, w1, w2, bn_scale, bn_shift, block_b=1)
    out2 = jax.block_until_ready(out2)
    assert jnp.allclose(out2, ref, atol=1e-5, rtol=1e-5), (
        float(jnp.max(jnp.abs(out2 - ref))))

    print("KERNEL_OK")
</pallas_src>

<mosaic_0001>
module attributes {stable_mosaic.version = 11 : i64} {
  func.func @cspa_kernel(%arg0: i32, %arg1: memref<2x64x256xf32, #tpu.memory_space<vmem>>, %arg2: memref<8x128xf32, #tpu.memory_space<vmem>>, %arg3: memref<128x8xf32, #tpu.memory_space<vmem>>, %arg4: memref<8x1xf32, #tpu.memory_space<vmem>>, %arg5: memref<256x33xf32, #tpu.memory_space<vmem>>, %arg6: memref<256x33xf32, #tpu.memory_space<vmem>>, %arg7: memref<256x33xf32, #tpu.memory_space<vmem>>, %arg8: memref<16x256xf32, #tpu.memory_space<vmem>>, %arg9: memref<16x256xf32, #tpu.memory_space<vmem>>, %arg10: memref<2x64x256xf32, #tpu.memory_space<vmem>>) attributes {dimension_semantics = [#tpu.dimension_semantics<parallel>], iteration_bounds = array<i64: 1>, scalar_prefetch = 0 : i64, scratch_operands = 0 : i64, tpu.core_type = #tpu.core_type<tc>, window_params = [{transform_indices = @transform_0, window_bounds = array<i64: 2, 64, 256>}, {pipeline_mode = #tpu.pipeline_mode<synchronous>, transform_indices = @transform_1, window_bounds = array<i64: 8, 128>}, {pipeline_mode = #tpu.pipeline_mode<synchronous>, transform_indices = @transform_2, window_bounds = array<i64: 128, 8>}, {pipeline_mode = #tpu.pipeline_mode<synchronous>, transform_indices = @transform_3, window_bounds = array<i64: 8, 1>}, {pipeline_mode = #tpu.pipeline_mode<synchronous>, transform_indices = @transform_4, window_bounds = array<i64: 256, 33>}, {pipeline_mode = #tpu.pipeline_mode<synchronous>, transform_indices = @transform_5, window_bounds = array<i64: 256, 33>}, {pipeline_mode = #tpu.pipeline_mode<synchronous>, transform_indices = @transform_6, window_bounds = array<i64: 256, 33>}, {pipeline_mode = #tpu.pipeline_mode<synchronous>, transform_indices = @transform_7, window_bounds = array<i64: 16, 256>}, {pipeline_mode = #tpu.pipeline_mode<synchronous>, transform_indices = @transform_8, window_bounds = array<i64: 16, 256>}, {transform_indices = @transform_9, window_bounds = array<i64: 2, 64, 256>}]} {
    %c0 = arith.constant 0 : index
    %c0_0 = arith.constant 0 : index
    %c0_1 = arith.constant 0 : index
    %0 = vector.load %arg1[%c0, %c0_0, %c0_1] : memref<2x64x256xf32, #tpu.memory_space<vmem>>, vector<2x64x256xf32>
    %1 = vector.shape_cast %0 : vector<2x64x256xf32> to vector<128x256xf32>
    %c1_i32 = arith.constant 1 : i32
    %2 = tpu.dynamic_rotate %1 by %c1_i32 dim 1 : vector<128x256xf32>, i32 -> vector<128x256xf32>
    %3 = arith.maximumf %1, %2 : vector<128x256xf32>
    %c2_i32 = arith.constant 2 : i32
    %4 = tpu.dynamic_rotate %3 by %c2_i32 dim 1 : vector<128x256xf32>, i32 -> vector<128x256xf32>
    %5 = arith.maximumf %3, %4 : vector<128x256xf32>
    %c4_i32 = arith.constant 4 : i32
    %6 = tpu.dynamic_rotate %5 by %c4_i32 dim 1 : vector<128x256xf32>, i32 -> vector<128x256xf32>
    %7 = arith.maximumf %5, %6 : vector<128x256xf32>
    %c8_i32 = arith.constant 8 : i32
    %8 = tpu.dynamic_rotate %7 by %c8_i32 dim 1 : vector<128x256xf32>, i32 -> vector<128x256xf32>
    %9 = arith.maximumf %7, %8 : vector<128x256xf32>
    %c16_i32 = arith.constant 16 : i32
    %10 = tpu.dynamic_rotate %1 by %c16_i32 dim 1 : vector<128x256xf32>, i32 -> vector<128x256xf32>
    %11 = arith.maximumf %1, %10 : vector<128x256xf32>
    %c32_i32 = arith.constant 32 : i32
    %12 = tpu.dynamic_rotate %11 by %c32_i32 dim 1 : vector<128x256xf32>, i32 -> vector<128x256xf32>
    %13 = arith.maximumf %11, %12 : vector<128x256xf32>
    %c64_i32 = arith.constant 64 : i32
    %14 = tpu.dynamic_rotate %13 by %c64_i32 dim 1 : vector<128x256xf32>, i32 -> vector<128x256xf32>
    %15 = arith.maximumf %13, %14 : vector<128x256xf32>
    %c128_i32 = arith.constant 128 : i32
    %16 = tpu.dynamic_rotate %15 by %c128_i32 dim 1 : vector<128x256xf32>, i32 -> vector<128x256xf32>
    %17 = arith.maximumf %15, %16 : vector<128x256xf32>
    %c0_2 = arith.constant 0 : index
    %c0_3 = arith.constant 0 : index
    %18 = vector.load %arg5[%c0_2, %c0_3] : memref<256x33xf32, #tpu.memory_space<vmem>>, vector<256x33xf32>
    %cst = arith.constant dense<0.000000e+00> : vector<128x33xf32>
    %19 = tpu.matmul %9, %18, %cst {dimension_numbers = #tpu.dot_dimension_numbers<[1], [0], [0], [1], [0, 0, 1, 1], [], []>} : vector<128x256xf32>, vector<256x33xf32>, vector<128x33xf32> -> vector<128x33xf32>
    %c0_4 = arith.constant 0 : index
    %c0_5 = arith.constant 0 : index
    %20 = vector.load %arg6[%c0_4, %c0_5] : memref<256x33xf32, #tpu.memory_space<vmem>>, vector<256x33xf32>
    %cst_6 = arith.constant dense<0.000000e+00> : vector<128x33xf32>
    %21 = tpu.matmul %17, %20, %cst_6 {dimension_numbers = #tpu.dot_dimension_numbers<[1], [0], [0], [1], [0, 0, 1, 1], [], []>} : vector<128x256xf32>, vector<256x33xf32>, vector<128x33xf32> -> vector<128x33xf32>
    %22 = arith.addf %19, %21 : vector<128x33xf32>
    %c0_7 = arith.constant 0 : index
    %c0_8 = arith.constant 0 : index
    %23 = vector.load %arg7[%c0_7, %c0_8] : memref<256x33xf32, #tpu.memory_space<vmem>>, vector<256x33xf32>
    %cst_9 = arith.constant dense<0.000000e+00> : vector<128x33xf32>
    %24 = tpu.matmul %1, %23, %cst_9 {dimension_numbers = #tpu.dot_dimension_numbers<[1], [0], [0], [1], [0, 0, 1, 1], [], []>} : vector<128x256xf32>, vector<256x33xf32>, vector<128x33xf32> -> vector<128x33xf32>
    %25 = arith.addf %22, %24 : vector<128x33xf32>
    %c0_10 = arith.constant 0 : index
    %c0_11 = arith.constant 0 : index
    %26 = vector.load %arg2[%c0_10, %c0_11] : memref<8x128xf32, #tpu.memory_space<vmem>>, vector<8x128xf32>
    %cst_12 = arith.constant dense<0.000000e+00> : vector<8x33xf32>
    %27 = tpu.matmul %26, %25, %cst_12 {dimension_numbers = #tpu.dot_dimension_numbers<[1], [0], [0], [1], [0, 0, 1, 1], [], []>} : vector<8x128xf32>, vector<128x33xf32>, vector<8x33xf32> -> vector<8x33xf32>
    %c0_13 = arith.constant 0 : index
    %c0_14 = arith.constant 0 : index
    %28 = vector.load %arg4[%c0_13, %c0_14] : memref<8x1xf32, #tpu.memory_space<vmem>>, vector<8x1xf32>
    %29 = vector.broadcast %28 : vector<8x1xf32> to vector<8x33xf32>
    %30 = arith.addf %27, %29 : vector<8x33xf32>
    %cst_15 = arith.constant 0.000000e+00 : f32
    %31 = vector.broadcast %cst_15 : f32 to vector<8x33xf32>
    %32 = arith.maximumf %30, %31 : vector<8x33xf32>
    %c0_16 = arith.constant 0 : index
    %c0_17 = arith.constant 0 : index
    %33 = vector.load %arg3[%c0_16, %c0_17] : memref<128x8xf32, #tpu.memory_space<vmem>>, vector<128x8xf32>
    %cst_18 = arith.constant dense<0.000000e+00> : vector<128x33xf32>
    %34 = tpu.matmul %33, %32, %cst_18 {dimension_numbers = #tpu.dot_dimension_numbers<[1], [0], [0], [1], [0, 0, 1, 1], [], []>} : vector<128x8xf32>, vector<8x33xf32>, vector<128x33xf32> -> vector<128x33xf32>
    %35 = arith.negf %34 : vector<128x33xf32>
    %36 = math.exp %35 : vector<128x33xf32>
    %cst_19 = arith.constant 1.000000e+00 : f32
    %37 = vector.broadcast %cst_19 : f32 to vector<128x33xf32>
    %38 = arith.addf %37, %36 : vector<128x33xf32>
    %39 = arith.divf %37, %38 : vector<128x33xf32>
    %40 = vector.extract_strided_slice %39 {offsets = [0, 0], sizes = [128, 16], strides = [1, 1]} : vector<128x33xf32> to vector<128x16xf32>
    %41 = vector.extract_strided_slice %39 {offsets = [0, 16], sizes = [128, 16], strides = [1, 1]} : vector<128x33xf32> to vector<128x16xf32>
    %42 = vector.extract_strided_slice %39 {offsets = [0, 32], sizes = [128, 1], strides = [1, 1]} : vector<128x33xf32> to vector<128x1xf32>
    %43 = vector.broadcast %42 : vector<128x1xf32> to vector<128x16xf32>
    %44 = arith.mulf %40, %43 : vector<128x16xf32>
    %c0_20 = arith.constant 0 : index
    %c0_21 = arith.constant 0 : index
    %45 = vector.load %arg8[%c0_20, %c0_21] : memref<16x256xf32, #tpu.memory_space<vmem>>, vector<16x256xf32>
    %cst_22 = arith.constant dense<0.000000e+00> : vector<128x256xf32>
    %46 = tpu.matmul %44, %45, %cst_22 {dimension_numbers = #tpu.dot_dimension_numbers<[1], [0], [0], [1], [0, 0, 1, 1], [], []>} : vector<128x16xf32>, vector<16x256xf32>, vector<128x256xf32> -> vector<128x256xf32>
    %c0_23 = arith.constant 0 : index
    %c0_24 = arith.constant 0 : index
    %47 = vector.load %arg9[%c0_23, %c0_24] : memref<16x256xf32, #tpu.memory_space<vmem>>, vector<16x256xf32>
    %cst_25 = arith.constant dense<0.000000e+00> : vector<128x256xf32>
    %48 = tpu.matmul %41, %47, %cst_25 {dimension_numbers = #tpu.dot_dimension_numbers<[1], [0], [0], [1], [0, 0, 1, 1], [], []>} : vector<128x16xf32>, vector<16x256xf32>, vector<128x256xf32> -> vector<128x256xf32>
    %49 = arith.mulf %1, %46 : vector<128x256xf32>
    %50 = arith.mulf %49, %48 : vector<128x256xf32>
    %51 = vector.shape_cast %50 : vector<128x256xf32> to vector<2x64x256xf32>
    %c0_26 = arith.constant 0 : index
    %c0_27 = arith.constant 0 : index
    %c0_28 = arith.constant 0 : index
    %52 = vector.load %arg10[%c0_26, %c0_27, %c0_28] : memref<2x64x256xf32, #tpu.memory_space<vmem>>, vector<2x64x256xf32>
    tpu.vector_store %arg10[%c0_26, %c0_27, %c0_28], %51 {strides = array<i32>} : memref<2x64x256xf32, #tpu.memory_space<vmem>>, vector<2x64x256xf32>,
    return
  }
  func.func @transform_0(%arg0: i32) -> (i32, i32, i32) {
    %c0_i32 = arith.constant 0 : i32
    %c0_i32_0 = arith.constant 0 : i32
    %c0_i32_1 = arith.constant 0 : i32
    return %arg0, %c0_i32, %c0_i32_0 : i32, i32, i32
  }
  func.func @transform_1(%arg0: i32) -> (i32, i32) {
    %c0_i32 = arith.constant 0 : i32
    %c0_i32_0 = arith.constant 0 : i32
    %c0_i32_1 = arith.constant 0 : i32
    return %c0_i32, %c0_i32_0 : i32, i32
  }
  func.func @transform_2(%arg0: i32) -> (i32, i32) {
    %c0_i32 = arith.constant 0 : i32
    %c0_i32_0 = arith.constant 0 : i32
    %c0_i32_1 = arith.constant 0 : i32
    return %c0_i32, %c0_i32_0 : i32, i32
  }
  func.func @transform_3(%arg0: i32) -> (i32, i32) {
    %c0_i32 = arith.constant 0 : i32
    %c0_i32_0 = arith.constant 0 : i32
    %c0_i32_1 = arith.constant 0 : i32
    return %c0_i32, %c0_i32_0 : i32, i32
  }
  func.func @transform_4(%arg0: i32) -> (i32, i32) {
    %c0_i32 = arith.constant 0 : i32
    %c0_i32_0 = arith.constant 0 : i32
    %c0_i32_1 = arith.constant 0 : i32
    return %c0_i32, %c0_i32_0 : i32, i32
  }
  func.func @transform_5(%arg0: i32) -> (i32, i32) {
    %c0_i32 = arith.constant 0 : i32
    %c0_i32_0 = arith.constant 0 : i32
    %c0_i32_1 = arith.constant 0 : i32
    return %c0_i32, %c0_i32_0 : i32, i32
  }
  func.func @transform_6(%arg0: i32) -> (i32, i32) {
    %c0_i32 = arith.constant 0 : i32
    %c0_i32_0 = arith.constant 0 : i32
    %c0_i32_1 = arith.constant 0 : i32
    return %c0_i32, %c0_i32_0 : i32, i32
  }
  func.func @transform_7(%arg0: i32) -> (i32, i32) {
    %c0_i32 = arith.constant 0 : i32
    %c0_i32_0 = arith.constant 0 : i32
    %c0_i32_1 = arith.constant 0 : i32
    return %c0_i32, %c0_i32_0 : i32, i32
  }
  func.func @transform_8(%arg0: i32) -> (i32, i32) {
    %c0_i32 = arith.constant 0 : i32
    %c0_i32_0 = arith.constant 0 : i32
    %c0_i32_1 = arith.constant 0 : i32
    return %c0_i32, %c0_i32_0 : i32, i32
  }
  func.func @transform_9(%arg0: i32) -> (i32, i32, i32) {
    %c0_i32 = arith.constant 0 : i32
    %c0_i32_0 = arith.constant 0 : i32
    %c0_i32_1 = arith.constant 0 : i32
    return %arg0, %c0_i32, %c0_i32_0 : i32, i32, i32
  }
}

</mosaic_0001>

<llo_original>
// kernel: tpu_custom_call.1
$region0: #{tpu_custom_call.1}
  #allocation0 [shape = 'u32[]', space=smem, size = 0x4, offset = 0x4, fixed_abs, tag = 'smem constant byte address 0x4 - core index']
  #allocation1 [shape = 'u32[144,128]{1,0:T(1,128)}', space=vmem, size = 0x12000, scoped, tag = 'internal scratch']
  %s0 = inlined_call_operand.vmem [shape: f32[2,64,256], index: 0, kind: input, shape index: {}]
  %s1 = inlined_call_operand.vmem [shape: f32[8,128], index: 1, kind: input, shape index: {}]
  %s2 = inlined_call_operand.vmem [shape: f32[128,8], index: 2, kind: input, shape index: {}]
  %s3 = inlined_call_operand.vmem [shape: f32[8,1], index: 3, kind: input, shape index: {}]
  %s4 = inlined_call_operand.vmem [shape: f32[256,33], index: 4, kind: input, shape index: {}]
  %s5 = inlined_call_operand.vmem [shape: f32[256,33], index: 5, kind: input, shape index: {}]
  %s6 = inlined_call_operand.vmem [shape: f32[256,33], index: 6, kind: input, shape index: {}]
  %s7 = inlined_call_operand.vmem [shape: f32[16,256], index: 7, kind: input, shape index: {}]
  %s8 = inlined_call_operand.vmem [shape: f32[16,256], index: 8, kind: input, shape index: {}]
  %s9 = inlined_call_operand.hbm [shape: f32[2,64,256], index: 9, kind: output, shape index: {}]
  %s10 = sld [smem:[#allocation0]]
  $region46: #{tpu_custom_call.1} parent=0
    _
  %s12 = ssub.s32 1, %s10
  %s13 = scalar_select 0, %s12, %s10
  $region1: #{tpu_custom_call.1} parent=0
    #allocation2 [shape = 'u8[131072]{0}', space=vmem, size = 0x20000, scoped, tag = 'output window, operand 0, single buffered']
    #allocation3 [shape = 's32[1]{0}', space=sflag, size = 0x4, scoped, tag = 'scoped memory for tpu_custom_call.1']
    %14 = vsyncpa [#allocation3], 0
    // Predicated region
    $region2: #{tpu_custom_call.1} parent=1 // pred_check
      _
    $region3: #{tpu_custom_call.1} parent=1 // pred_check_branch
      %16 = sbr.rel (0) target = $region5
    $region4: #{tpu_custom_call.1} parent=1 // pred_region
      _
    $region5: #{tpu_custom_call.1} parent=1 // pred_fallthru
      _
    // Predicated region
    $region6: #{tpu_custom_call.1} parent=1 // pred_check
      _
    $region7: #{tpu_custom_call.1} parent=1 // pred_check_branch
      %18 = sbr.rel (0) target = $region9
    $region8: #{tpu_custom_call.1} parent=1 // pred_region
      _
    $region9: #{tpu_custom_call.1} parent=1 // pred_fallthru
      _
    // Predicated region
    $region10: #{tpu_custom_call.1} parent=1 // pred_check
      _
    $region11: #{tpu_custom_call.1} parent=1 // pred_check_branch
      %20 = sbr.rel (0) target = $region13
    $region12: #{tpu_custom_call.1} parent=1 // pred_region
      _
    $region13: #{tpu_custom_call.1} parent=1 // pred_fallthru
      _
    // Predicated region
    $region14: #{tpu_custom_call.1} parent=1 // pred_check
      _
    $region15: #{tpu_custom_call.1} parent=1 // pred_check_branch
      %22 = sbr.rel (0) target = $region17
    $region16: #{tpu_custom_call.1} parent=1 // pred_region
      _
    $region17: #{tpu_custom_call.1} parent=1 // pred_fallthru
      _
    // Predicated region
    $region18: #{tpu_custom_call.1} parent=1 // pred_check
      _
    $region19: #{tpu_custom_call.1} parent=1 // pred_check_branch
      %24 = sbr.rel (0) target = $region21
    $region20: #{tpu_custom_call.1} parent=1 // pred_region
      _
    $region21: #{tpu_custom_call.1} parent=1 // pred_fallthru
      _
    // Predicated region
    $region22: #{tpu_custom_call.1} parent=1 // pred_check
      _
    $region23: #{tpu_custom_call.1} parent=1 // pred_check_branch
      %26 = sbr.rel (0) target = $region25
    $region24: #{tpu_custom_call.1} parent=1 // pred_region
      _
    $region25: #{tpu_custom_call.1} parent=1 // pred_fallthru
      _
    // Predicated region
    $region26: #{tpu_custom_call.1} parent=1 // pred_check
      _
    $region27: #{tpu_custom_call.1} parent=1 // pred_check_branch
      %28 = sbr.rel (0) target = $region29
    $region28: #{tpu_custom_call.1} parent=1 // pred_region
      _
    $region29: #{tpu_custom_call.1} parent=1 // pred_fallthru
      _
    // Predicated region
    $region30: #{tpu_custom_call.1} parent=1 // pred_check
      _
    $region31: #{tpu_custom_call.1} parent=1 // pred_check_branch
      %30 = sbr.rel (0) target = $region33
    $region32: #{tpu_custom_call.1} parent=1 // pred_region
      _
    $region33: #{tpu_custom_call.1} parent=1 // pred_fallthru
      _
    // Predicated region
    $region34: #{tpu_custom_call.1} parent=1 // pred_check
      _
    $region35: #{tpu_custom_call.1} parent=1 // pred_check_branch
      %32 = sbr.rel (0) target = $region37
    $region36: #{tpu_custom_call.1} parent=1 // pred_region
      _
    $region37: #{tpu_custom_call.1} parent=1 // pred_fallthru
      _
    %v33 = vld [vmem:[%s0] sm:$0xff]
    %v34 = vld [vmem:[%s0 + $0x8] sm:$0xff]
    %v35 = vld [vmem:[%s0 + $0x10] sm:$0xff]
    %v36 = vld [vmem:[%s0 + $0x18] sm:$0xff]
    %v37 = vld [vmem:[%s0 + $0x20] sm:$0xff]
    %v38 = vld [vmem:[%s0 + $0x28] sm:$0xff]
    %v39 = vld [vmem:[%s0 + $0x30] sm:$0xff]
    %v40 = vld [vmem:[%s0 + $0x38] sm:$0xff]
    %v41 = vld [vmem:[%s0 + $0x40] sm:$0xff]
    %v42 = vld [vmem:[%s0 + $0x48] sm:$0xff]
    %v43 = vld [vmem:[%s0 + $0x50] sm:$0xff]
    %v44 = vld [vmem:[%s0 + $0x58] sm:$0xff]
    %v45 = vld [vmem:[%s0 + $0x60] sm:$0xff]
    %v46 = vld [vmem:[%s0 + $0x68] sm:$0xff]
    %v47 = vld [vmem:[%s0 + $0x70] sm:$0xff]
    %v48 = vld [vmem:[%s0 + $0x78] sm:$0xff]
    %v49 = vld [vmem:[%s0 + $0x80] sm:$0xff]
    %v50 = vld [vmem:[%s0 + $0x88] sm:$0xff]
    %v51 = vld [vmem:[%s0 + $0x90] sm:$0xff]
    %v52 = vld [vmem:[%s0 + $0x98] sm:$0xff]
    %v53 = vld [vmem:[%s0 + $0xa0] sm:$0xff]
    %v54 = vld [vmem:[%s0 + $0xa8] sm:$0xff]
    %v55 = vld [vmem:[%s0 + $0xb0] sm:$0xff]
    %v56 = vld [vmem:[%s0 + $0xb8] sm:$0xff]
    %v57 = vld [vmem:[%s0 + $0xc0] sm:$0xff]
    %v58 = vld [vmem:[%s0 + $0xc8] sm:$0xff]
    %v59 = vld [vmem:[%s0 + $0xd0] sm:$0xff]
    %v60 = vld [vmem:[%s0 + $0xd8] sm:$0xff]
    %v61 = vld [vmem:[%s0 + $0xe0] sm:$0xff]
    %v62 = vld [vmem:[%s0 + $0xe8] sm:$0xff]
    %v63 = vld [vmem:[%s0 + $0xf0] sm:$0xff]
    %v64 = vld [vmem:[%s0 + $0xf8] sm:$0xff]
    %65 = vrot.lane.b32.xlu0 %v33, 1
    %v66 = vpop.permute.xlu0 %65
    %67 = vrot.lane.b32.xlu0 %v35, 1
    %v68 = vpop.permute.xlu0 %67
    %69 = vrot.lane.b32.xlu0 %v37, 1
    %v70 = vpop.permute.xlu0 %69
    %71 = vrot.lane.b32.xlu0 %v39, 1
    %v72 = vpop.permute.xlu0 %71
    %73 = vrot.lane.b32.xlu0 %v41, 1
    %v74 = vpop.permute.xlu0 %73
    %75 = vrot.lane.b32.xlu0 %v43, 1
    %v76 = vpop.permute.xlu0 %75
    %77 = vrot.lane.b32.xlu0 %v45, 1
    %v78 = vpop.permute.xlu0 %77
    %79 = vrot.lane.b32.xlu0 %v47, 1
    %v80 = vpop.permute.xlu0 %79
    %81 = vrot.lane.b32.xlu0 %v49, 1
    %v82 = vpop.permute.xlu0 %81
    %83 = vrot.lane.b32.xlu0 %v51, 1
    %v84 = vpop.permute.xlu0 %83
    %85 = vrot.lane.b32.xlu0 %v53, 1
    %v86 = vpop.permute.xlu0 %85
    %87 = vrot.lane.b32.xlu0 %v55, 1
    %v88 = vpop.permute.xlu0 %87
    %89 = vrot.lane.b32.xlu0 %v57, 1
    %v90 = vpop.permute.xlu0 %89
    %91 = vrot.lane.b32.xlu0 %v59, 1
    %v92 = vpop.permute.xlu0 %91
    %93 = vrot.lane.b32.xlu0 %v61, 1
    %v94 = vpop.permute.xlu0 %93
    %95 = vrot.lane.b32.xlu0 %v63, 1
    %v96 = vpop.permute.xlu0 %95
    %97 = vrot.lane.b32.xlu0 %v34, 1
    %v98 = vpop.permute.xlu0 %97
    %99 = vrot.lane.b32.xlu0 %v36, 1
    %v100 = vpop.permute.xlu0 %99
    %101 = vrot.lane.b32.xlu0 %v38, 1
    %v102 = vpop.permute.xlu0 %101
    %103 = vrot.lane.b32.xlu0 %v40, 1
    %v104 = vpop.permute.xlu0 %103
    %105 = vrot.lane.b32.xlu0 %v42, 1
    %v106 = vpop.permute.xlu0 %105
    %107 = vrot.lane.b32.xlu0 %v44, 1
    %v108 = vpop.permute.xlu0 %107
    %109 = vrot.lane.b32.xlu0 %v46, 1
    %v110 = vpop.permute.xlu0 %109
    %111 = vrot.lane.b32.xlu0 %v48, 1
    %v112 = vpop.permute.xlu0 %111
    %113 = vrot.lane.b32.xlu0 %v50, 1
    %v114 = vpop.permute.xlu0 %113
    %115 = vrot.lane.b32.xlu0 %v52, 1
    %v116 = vpop.permute.xlu0 %115
    %117 = vrot.lane.b32.xlu0 %v54, 1
    %v118 = vpop.permute.xlu0 %117
    %119 = vrot.lane.b32.xlu0 %v56, 1
    %v120 = vpop.permute.xlu0 %119
    %121 = vrot.lane.b32.xlu0 %v58, 1
    %v122 = vpop.permute.xlu0 %121
    %123 = vrot.lane.b32.xlu0 %v60, 1
    %v124 = vpop.permute.xlu0 %123
    %125 = vrot.lane.b32.xlu0 %v62, 1
    %v126 = vpop.permute.xlu0 %125
    %127 = vrot.lane.b32.xlu0 %v64, 1
    %v128 = vpop.permute.xlu0 %127
    %v129 = vlaneseq
    %v130 = vand.u32 %v129, 127
    %vm131 = vcmp.lt.s32.totalorder %v130, 1
    %v132 = vsel %vm131, %v66, %v98
    %v133 = vsel %vm131, %v68, %v100
    %v134 = vsel %vm131, %v70, %v102
    %v135 = vsel %vm131, %v72, %v104
    %v136 = vsel %vm131, %v74, %v106
    %v137 = vsel %vm131, %v76, %v108
    %v138 = vsel %vm131, %v78, %v110
    %v139 = vsel %vm131, %v80, %v112
    %v140 = vsel %vm131, %v82, %v114
    %v141 = vsel %vm131, %v84, %v116
    %v142 = vsel %vm131, %v86, %v118
    %v143 = vsel %vm131, %v88, %v120
    %v144 = vsel %vm131, %v90, %v122
    %v145 = vsel %vm131, %v92, %v124
    %v146 = vsel %vm131, %v94, %v126
    %v147 = vsel %vm131, %v96, %v128
    %v148 = vsel %vm131, %v98, %v66
    %v149 = vsel %vm131, %v100, %v68
    %v150 = vsel %vm131, %v102, %v70
    %v151 = vsel %vm131, %v104, %v72
    %v152 = vsel %vm131, %v106, %v74
    %v153 = vsel %vm131, %v108, %v76
    %v154 = vsel %vm131, %v110, %v78
    %v155 = vsel %vm131, %v112, %v80
    %v156 = vsel %vm131, %v114, %v82
    %v157 = vsel %vm131, %v116, %v84
    %v158 = vsel %vm131, %v118, %v86
    %v159 = vsel %vm131, %v120, %v88
    %v160 = vsel %vm131, %v122, %v90
    %v161 = vsel %vm131, %v124, %v92
    %v162 = vsel %vm131, %v126, %v94
    %v163 = vsel %vm131, %v128, %v96
    %v164 = vmax.f32 %v33, %v148
    %v165 = vmax.f32 %v34, %v132
    %v166 = vmax.f32 %v35, %v149
    %v167 = vmax.f32 %v36, %v133
    %v168 = vmax.f32 %v37, %v150
    %v169 = vmax.f32 %v38, %v134
    %v170 = vmax.f32 %v39, %v151
    %v171 = vmax.f32 %v40, %v135
    %v172 = vmax.f32 %v41, %v152
    %v173 = vmax.f32 %v42, %v136
    %v174 = vmax.f32 %v43, %v153
    %v175 = vmax.f32 %v44, %v137
    %v176 = vmax.f32 %v45, %v154
    %v177 = vmax.f32 %v46, %v138
    %v178 = vmax.f32 %v47, %v155
    %v179 = vmax.f32 %v48, %v139
    %v180 = vmax.f32 %v49, %v156
    %v181 = vmax.f32 %v50, %v140
    %v182 = vmax.f32 %v51, %v157
    %v183 = vmax.f32 %v52, %v141
    %v184 = vmax.f32 %v53, %v158
    %v185 = vmax.f32 %v54, %v142
    %v186 = vmax.f32 %v55, %v159
    %v187 = vmax.f32 %v56, %v143
    %v188 = vmax.f32 %v57, %v160
    %v189 = vmax.f32 %v58, %v144
    %v190 = vmax.f32 %v59, %v161
    %v191 = vmax.f32 %v60, %v145
    %v192 = vmax.f32 %v61, %v162
    %v193 = vmax.f32 %v62, %v146
    %v194 = vmax.f32 %v63, %v163
    %v195 = vmax.f32 %v64, %v147
    %196 = vrot.lane.b32.xlu0 %v164, 2
    %v197 = vpop.permute.xlu0 %196
    %198 = vrot.lane.b32.xlu0 %v166, 2
    %v199 = vpop.permute.xlu0 %198
    %200 = vrot.lane.b32.xlu0 %v168, 2
    %v201 = vpop.permute.xlu0 %200
    %202 = vrot.lane.b32.xlu0 %v170, 2
    %v203 = vpop.permute.xlu0 %202
    %204 = vrot.lane.b32.xlu0 %v172, 2
    %v205 = vpop.permute.xlu0 %204
    %206 = vrot.lane.b32.xlu0 %v174, 2
    %v207 = vpop.permute.xlu0 %206
    %208 = vrot.lane.b32.xlu0 %v176, 2
    %v209 = vpop.permute.xlu0 %208
    %210 = vrot.lane.b32.xlu0 %v178, 2
    %v211 = vpop.permute.xlu0 %210
    %212 = vrot.lane.b32.xlu0 %v180, 2
    %v213 = vpop.permute.xlu0 %212
    %214 = vrot.lane.b32.xlu0 %v182, 2
    %v215 = vpop.permute.xlu0 %214
    %216 = vrot.lane.b32.xlu0 %v184, 2
    %v217 = vpop.permute.xlu0 %216
    %218 = vrot.lane.b32.xlu0 %v186, 2
    %v219 = vpop.permute.xlu0 %218
    %220 = vrot.lane.b32.xlu0 %v188, 2
    %v221 = vpop.permute.xlu0 %220
    %222 = vrot.lane.b32.xlu0 %v190, 2
    %v223 = vpop.permute.xlu0 %222
    %224 = vrot.lane.b32.xlu0 %v192, 2
    %v225 = vpop.permute.xlu0 %224
    %226 = vrot.lane.b32.xlu0 %v194, 2
    %v227 = vpop.permute.xlu0 %226
    %228 = vrot.lane.b32.xlu0 %v165, 2
    %v229 = vpop.permute.xlu0 %228
    %230 = vrot.lane.b32.xlu0 %v167, 2
    %v231 = vpop.permute.xlu0 %230
    %232 = vrot.lane.b32.xlu0 %v169, 2
    %v233 = vpop.permute.xlu0 %232
    %234 = vrot.lane.b32.xlu0 %v171, 2
    %v235 = vpop.permute.xlu0 %234
    %236 = vrot.lane.b32.xlu0 %v173, 2
    %v237 = vpop.permute.xlu0 %236
    %238 = vrot.lane.b32.xlu0 %v175, 2
    %v239 = vpop.permute.xlu0 %238
    %240 = vrot.lane.b32.xlu0 %v177, 2
    %v241 = vpop.permute.xlu0 %240
    %242 = vrot.lane.b32.xlu0 %v179, 2
    %v243 = vpop.permute.xlu0 %242
    %244 = vrot.lane.b32.xlu0 %v181, 2
    %v245 = vpop.permute.xlu0 %244
    %246 = vrot.lane.b32.xlu0 %v183, 2
    %v247 = vpop.permute.xlu0 %246
    %248 = vrot.lane.b32.xlu0 %v185, 2
    %v249 = vpop.permute.xlu0 %248
    %250 = vrot.lane.b32.xlu0 %v187, 2
    %v251 = vpop.permute.xlu0 %250
    %252 = vrot.lane.b32.xlu0 %v189, 2
    %v253 = vpop.permute.xlu0 %252
    %254 = vrot.lane.b32.xlu0 %v191, 2
    %v255 = vpop.permute.xlu0 %254
    %256 = vrot.lane.b32.xlu0 %v193, 2
    %v257 = vpop.permute.xlu0 %256
    %258 = vrot.lane.b32.xlu0 %v195, 2
    %v259 = vpop.permute.xlu0 %258
    %vm260 = vcmp.lt.s32.totalorder %v130, 2
    %v261 = vsel %vm260, %v197, %v229
    %v262 = vsel %vm260, %v199, %v231
    %v263 = vsel %vm260, %v201, %v233
    %v264 = vsel %vm260, %v203, %v235
    %v265 = vsel %vm260, %v205, %v237
    %v266 = vsel %vm260, %v207, %v239
    %v267 = vsel %vm260, %v209, %v241
    %v268 = vsel %vm260, %v211, %v243
    %v269 = vsel %vm260, %v213, %v245
    %v270 = vsel %vm260, %v215, %v247
    %v271 = vsel %vm260, %v217, %v249
    %v272 = vsel %vm260, %v219, %v251
    %v273 = vsel %vm260, %v221, %v253
    %v274 = vsel %vm260, %v223, %v255
    %v275 = vsel %vm260, %v225, %v257
    %v276 = vsel %vm260, %v227, %v259
    %v277 = vsel %vm260, %v229, %v197
    %v278 = vsel %vm260, %v231, %v199
    %v279 = vsel %vm260, %v233, %v201
    %v280 = vsel %vm260, %v235, %v203
    %v281 = vsel %vm260, %v237, %v205
    %v282 = vsel %vm260, %v239, %v207
    %v283 = vsel %vm260, %v241, %v209
    %v284 = vsel %vm260, %v243, %v211
    %v285 = vsel %vm260, %v245, %v213
    %v286 = vsel %vm260, %v247, %v215
    %v287 = vsel %vm260, %v249, %v217
    %v288 = vsel %vm260, %v251, %v219
    %v289 = vsel %vm260, %v253, %v221
    %v290 = vsel %vm260, %v255, %v223
    %v291 = vsel %vm260, %v257, %v225
    %v292 = vsel %vm260, %v259, %v227
    %v293 = vmax.f32 %v164, %v277
    %v294 = vmax.f32 %v165, %v261
    %v295 = vmax.f32 %v166, %v278
    %v296 = vmax.f32 %v167, %v262
    %v297 = vmax.f32 %v168, %v279
    %v298 = vmax.f32 %v169, %v263
    %v299 = vmax.f32 %v170, %v280
    %v300 = vmax.f32 %v171, %v264
    %v301 = vmax.f32 %v172, %v281
    %v302 = vmax.f32 %v173, %v265
    %v303 = vmax.f32 %v174, %v282
    %v304 = vmax.f32 %v175, %v266
    %v305 = vmax.f32 %v176, %v283
    %v306 = vmax.f32 %v177, %v267
    %v307 = vmax.f32 %v178, %v284
    %v308 = vmax.f32 %v179, %v268
    %v309 = vmax.f32 %v180, %v285
    %v310 = vmax.f32 %v181, %v269
    %v311 = vmax.f32 %v182, %v286
    %v312 = vmax.f32 %v183, %v270
    %v313 = vmax.f32 %v184, %v287
    %v314 = vmax.f32 %v185, %v271
    %v315 = vmax.f32 %v186, %v288
    %v316 = vmax.f32 %v187, %v272
    %v317 = vmax.f32 %v188, %v289
    %v318 = vmax.f32 %v189, %v273
    %v319 = vmax.f32 %v190, %v290
    %v320 = vmax.f32 %v191, %v274
    %v321 = vmax.f32 %v192, %v291
    %v322 = vmax.f32 %v193, %v275
    %v323 = vmax.f32 %v194, %v292
    %v324 = vmax.f32 %v195, %v276
    %325 = vrot.lane.b32.xlu0 %v293, 4
    %v326 = vpop.permute.xlu0 %325
    %327 = vrot.lane.b32.xlu0 %v295, 4
    %v328 = vpop.permute.xlu0 %327
    %329 = vrot.lane.b32.xlu0 %v297, 4
    %v330 = vpop.permute.xlu0 %329
    %331 = vrot.lane.b32.xlu0 %v299, 4
    %v332 = vpop.permute.xlu0 %331
    %333 = vrot.lane.b32.xlu0 %v301, 4
    %v334 = vpop.permute.xlu0 %333
    %335 = vrot.lane.b32.xlu0 %v303, 4
    %v336 = vpop.permute.xlu0 %335
    %337 = vrot.lane.b32.xlu0 %v305, 4
    %v338 = vpop.permute.xlu0 %337
    %339 = vrot.lane.b32.xlu0 %v307, 4
    %v340 = vpop.permute.xlu0 %339
    %341 = vrot.lane.b32.xlu0 %v309, 4
    %v342 = vpop.permute.xlu0 %341
    %343 = vrot.lane.b32.xlu0 %v311, 4
    %v344 = vpop.permute.xlu0 %343
    %345 = vrot.lane.b32.xlu0 %v313, 4
    %v346 = vpop.permute.xlu0 %345
    %347 = vrot.lane.b32.xlu0 %v315, 4
    %v348 = vpop.permute.xlu0 %347
    %349 = vrot.lane.b32.xlu0 %v317, 4
    %v350 = vpop.permute.xlu0 %349
    %351 = vrot.lane.b32.xlu0 %v319, 4
    %v352 = vpop.permute.xlu0 %351
    %353 = vrot.lane.b32.xlu0 %v321, 4
    %v354 = vpop.permute.xlu0 %353
    %355 = vrot.lane.b32.xlu0 %v323, 4
    %v356 = vpop.permute.xlu0 %355
    %357 = vrot.lane.b32.xlu0 %v294, 4
    %v358 = vpop.permute.xlu0 %357
    %359 = vrot.lane.b32.xlu0 %v296, 4
    %v360 = vpop.permute.xlu0 %359
    %361 = vrot.lane.b32.xlu0 %v298, 4
    %v362 = vpop.permute.xlu0 %361
    %363 = vrot.lane.b32.xlu0 %v300, 4
    %v364 = vpop.permute.xlu0 %363
    %365 = vrot.lane.b32.xlu0 %v302, 4
    %v366 = vpop.permute.xlu0 %365
    %367 = vrot.lane.b32.xlu0 %v304, 4
    %v368 = vpop.permute.xlu0 %367
    %369 = vrot.lane.b32.xlu0 %v306, 4
    %v370 = vpop.permute.xlu0 %369
    %371 = vrot.lane.b32.xlu0 %v308, 4
    %v372 = vpop.permute.xlu0 %371
    %373 = vrot.lane.b32.xlu0 %v310, 4
    %v374 = vpop.permute.xlu0 %373
    %375 = vrot.lane.b32.xlu0 %v312, 4
    %v376 = vpop.permute.xlu0 %375
    %377 = vrot.lane.b32.xlu0 %v314, 4
    %v378 = vpop.permute.xlu0 %377
    %379 = vrot.lane.b32.xlu0 %v316, 4
    %v380 = vpop.permute.xlu0 %379
    %381 = vrot.lane.b32.xlu0 %v318, 4
    %v382 = vpop.permute.xlu0 %381
    %383 = vrot.lane.b32.xlu0 %v320, 4
    %v384 = vpop.permute.xlu0 %383
    %385 = vrot.lane.b32.xlu0 %v322, 4
    %v386 = vpop.permute.xlu0 %385
    %387 = vrot.lane.b32.xlu0 %v324, 4
    %v388 = vpop.permute.xlu0 %387
    %vm389 = vcmp.lt.s32.totalorder %v130, 4
    %v390 = vsel %vm389, %v326, %v358
    %v391 = vsel %vm389, %v328, %v360
    %v392 = vsel %vm389, %v330, %v362
    %v393 = vsel %vm389, %v332, %v364
    %v394 = vsel %vm389, %v334, %v366
    %v395 = vsel %vm389, %v336, %v368
    %v396 = vsel %vm389, %v338, %v370
    %v397 = vsel %vm389, %v340, %v372
    %v398 = vsel %vm389, %v342, %v374
    %v399 = vsel %vm389, %v344, %v376
    %v400 = vsel %vm389, %v346, %v378
    %v401 = vsel %vm389, %v348, %v380
    %v402 = vsel %vm389, %v350, %v382
    %v403 = vsel %vm389, %v352, %v384
    %v404 = vsel %vm389, %v354, %v386
    %v405 = vsel %vm389, %v356, %v388
    %v406 = vsel %vm389, %v358, %v326
    %v407 = vsel %vm389, %v360, %v328
    %v408 = vsel %vm389, %v362, %v330
    %v409 = vsel %vm389, %v364, %v332
    %v410 = vsel %vm389, %v366, %v334
    %v411 = vsel %vm389, %v368, %v336
    %v412 = vsel %vm389, %v370, %v338
    %v413 = vsel %vm389, %v372, %v340
    %v414 = vsel %vm389, %v374, %v342
    %v415 = vsel %vm389, %v376, %v344
    %v416 = vsel %vm389, %v378, %v346
    %v417 = vsel %vm389, %v380, %v348
    %v418 = vsel %vm389, %v382, %v350
    %v419 = vsel %vm389, %v384, %v352
    %v420 = vsel %vm389, %v386, %v354
    %v421 = vsel %vm389, %v388, %v356
    %v422 = vmax.f32 %v293, %v406
    %v423 = vmax.f32 %v294, %v390
    %v424 = vmax.f32 %v295, %v407
    %v425 = vmax.f32 %v296, %v391
    %v426 = vmax.f32 %v297, %v408
    %v427 = vmax.f32 %v298, %v392
    %v428 = vmax.f32 %v299, %v409
    %v429 = vmax.f32 %v300, %v393
    %v430 = vmax.f32 %v301, %v410
    %v431 = vmax.f32 %v302, %v394
    %v432 = vmax.f32 %v303, %v411
    %v433 = vmax.f32 %v304, %v395
    %v434 = vmax.f32 %v305, %v412
    %v435 = vmax.f32 %v306, %v396
    %v436 = vmax.f32 %v307, %v413
    %v437 = vmax.f32 %v308, %v397
    %v438 = vmax.f32 %v309, %v414
    %v439 = vmax.f32 %v310, %v398
    %v440 = vmax.f32 %v311, %v415
    %v441 = vmax.f32 %v312, %v399
    %v442 = vmax.f32 %v313, %v416
    %v443 = vmax.f32 %v314, %v400
    %v444 = vmax.f32 %v315, %v417
    %v445 = vmax.f32 %v316, %v401
    %v446 = vmax.f32 %v317, %v418
    %v447 = vmax.f32 %v318, %v402
    %v448 = vmax.f32 %v319, %v419
    %v449 = vmax.f32 %v320, %v403
    %v450 = vmax.f32 %v321, %v420
    %v451 = vmax.f32 %v322, %v404
    %v452 = vmax.f32 %v323, %v421
    %v453 = vmax.f32 %v324, %v405
    %454 = vrot.lane.b32.xlu0 %v422, 8
    %v455 = vpop.permute.xlu0 %454
    %456 = vrot.lane.b32.xlu0 %v424, 8
    %v457 = vpop.permute.xlu0 %456
    %458 = vrot.lane.b32.xlu0 %v426, 8
    %v459 = vpop.permute.xlu0 %458
    %460 = vrot.lane.b32.xlu0 %v428, 8
    %v461 = vpop.permute.xlu0 %460
    %462 = vrot.lane.b32.xlu0 %v430, 8
    %v463 = vpop.permute.xlu0 %462
    %464 = vrot.lane.b32.xlu0 %v432, 8
    %v465 = vpop.permute.xlu0 %464
    %466 = vrot.lane.b32.xlu0 %v434, 8
    %v467 = vpop.permute.xlu0 %466
    %468 = vrot.lane.b32.xlu0 %v436, 8
    %v469 = vpop.permute.xlu0 %468
    %470 = vrot.lane.b32.xlu0 %v438, 8
    %v471 = vpop.permute.xlu0 %470
    %472 = vrot.lane.b32.xlu0 %v440, 8
    %v473 = vpop.permute.xlu0 %472
    %474 = vrot.lane.b32.xlu0 %v442, 8
    %v475 = vpop.permute.xlu0 %474
    %476 = vrot.lane.b32.xlu0 %v444, 8
    %v477 = vpop.permute.xlu0 %476
    %478 = vrot.lane.b32.xlu0 %v446, 8
    %v479 = vpop.permute.xlu0 %478
    %480 = vrot.lane.b32.xlu0 %v448, 8
    %v481 = vpop.permute.xlu0 %480
    %482 = vrot.lane.b32.xlu0 %v450, 8
    %v483 = vpop.permute.xlu0 %482
    %484 = vrot.lane.b32.xlu0 %v452, 8
    %v485 = vpop.permute.xlu0 %484
    %486 = vrot.lane.b32.xlu0 %v423, 8
    %v487 = vpop.permute.xlu0 %486
    %488 = vrot.lane.b32.xlu0 %v425, 8
    %v489 = vpop.permute.xlu0 %488
    %490 = vrot.lane.b32.xlu0 %v427, 8
    %v491 = vpop.permute.xlu0 %490
    %492 = vrot.lane.b32.xlu0 %v429, 8
    %v493 = vpop.permute.xlu0 %492
    %494 = vrot.lane.b32.xlu0 %v431, 8
    %v495 = vpop.permute.xlu0 %494
    %496 = vrot.lane.b32.xlu0 %v433, 8
    %v497 = vpop.permute.xlu0 %496
    %498 = vrot.lane.b32.xlu0 %v435, 8
    %v499 = vpop.permute.xlu0 %498
    %500 = vrot.lane.b32.xlu0 %v437, 8
    %v501 = vpop.permute.xlu0 %500
    %502 = vrot.lane.b32.xlu0 %v439, 8
    %v503 = vpop.permute.xlu0 %502
    %504 = vrot.lane.b32.xlu0 %v441, 8
    %v505 = vpop.permute.xlu0 %504
    %506 = vrot.lane.b32.xlu0 %v443, 8
    %v507 = vpop.permute.xlu0 %506
    %508 = vrot.lane.b32.xlu0 %v445, 8
    %v509 = vpop.permute.xlu0 %508
    %510 = vrot.lane.b32.xlu0 %v447, 8
    %v511 = vpop.permute.xlu0 %510
    %512 = vrot.lane.b32.xlu0 %v449, 8
    %v513 = vpop.permute.xlu0 %512
    %514 = vrot.lane.b32.xlu0 %v451, 8
    %v515 = vpop.permute.xlu0 %514
    %516 = vrot.lane.b32.xlu0 %v453, 8
    %v517 = vpop.permute.xlu0 %516
    %vm518 = vcmp.lt.s32.totalorder %v130, 8
    %v519 = vsel %vm518, %v455, %v487
    %v520 = vsel %vm518, %v457, %v489
    %v521 = vsel %vm518, %v459, %v491
    %v522 = vsel %vm518, %v461, %v493
    %v523 = vsel %vm518, %v463, %v495
    %v524 = vsel %vm518, %v465, %v497
    %v525 = vsel %vm518, %v467, %v499
    %v526 = vsel %vm518, %v469, %v501
    %v527 = vsel %vm518, %v471, %v503
    %v528 = vsel %vm518, %v473, %v505
    %v529 = vsel %vm518, %v475, %v507
    %v530 = vsel %vm518, %v477, %v509
    %v531 = vsel %vm518, %v479, %v511
    %v532 = vsel %vm518, %v481, %v513
    %v533 = vsel %vm518, %v483, %v515
    %v534 = vsel %vm518, %v485, %v517
    %v535 = vsel %vm518, %v487, %v455
    %v536 = vsel %vm518, %v489, %v457
    %v537 = vsel %vm518, %v491, %v459
    %v538 = vsel %vm518, %v493, %v461
    %v539 = vsel %vm518, %v495, %v463
    %v540 = vsel %vm518, %v497, %v465
    %v541 = vsel %vm518, %v499, %v467
    %v542 = vsel %vm518, %v501, %v469
    %v543 = vsel %vm518, %v503, %v471
    %v544 = vsel %vm518, %v505, %v473
    %v545 = vsel %vm518, %v507, %v475
    %v546 = vsel %vm518, %v509, %v477
    %v547 = vsel %vm518, %v511, %v479
    %v548 = vsel %vm518, %v513, %v481
    %v549 = vsel %vm518, %v515, %v483
    %v550 = vsel %vm518, %v517, %v485
    %v551 = vmax.f32 %v422, %v535
    %v552 = vmax.f32 %v423, %v519
    %v553 = vmax.f32 %v424, %v536
    %v554 = vmax.f32 %v425, %v520
    %v555 = vmax.f32 %v426, %v537
    %v556 = vmax.f32 %v427, %v521
    %v557 = vmax.f32 %v428, %v538
    %v558 = vmax.f32 %v429, %v522
    %v559 = vmax.f32 %v430, %v539
    %v560 = vmax.f32 %v431, %v523
    %v561 = vmax.f32 %v432, %v540
    %v562 = vmax.f32 %v433, %v524
    %v563 = vmax.f32 %v434, %v541
    %v564 = vmax.f32 %v435, %v525
    %v565 = vmax.f32 %v436, %v542
    %v566 = vmax.f32 %v437, %v526
    %v567 = vmax.f32 %v438, %v543
    %v568 = vmax.f32 %v439, %v527
    %v569 = vmax.f32 %v440, %v544
    %v570 = vmax.f32 %v441, %v528
    %v571 = vmax.f32 %v442, %v545
    %v572 = vmax.f32 %v443, %v529
    %v573 = vmax.f32 %v444, %v546
    %v574 = vmax.f32 %v445, %v530
    %v575 = vmax.f32 %v446, %v547
    %v576 = vmax.f32 %v447, %v531
    %v577 = vmax.f32 %v448, %v548
    %v578 = vmax.f32 %v449, %v532
    %v579 = vmax.f32 %v450, %v549
    %v580 = vmax.f32 %v451, %v533
    %v581 = vmax.f32 %v452, %v550
    %v582 = vmax.f32 %v453, %v534
    %583 = vrot.lane.b32.xlu0 %v33, 16
    %v584 = vpop.permute.xlu0 %583
    %585 = vrot.lane.b32.xlu0 %v35, 16
    %v586 = vpop.permute.xlu0 %585
    %587 = vrot.lane.b32.xlu0 %v37, 16
    %v588 = vpop.permute.xlu0 %587
    %589 = vrot.lane.b32.xlu0 %v39, 16
    %v590 = vpop.permute.xlu0 %589
    %591 = vrot.lane.b32.xlu0 %v41, 16
    %v592 = vpop.permute.xlu0 %591
    %593 = vrot.lane.b32.xlu0 %v43, 16
    %v594 = vpop.permute.xlu0 %593
    %595 = vrot.lane.b32.xlu0 %v45, 16
    %v596 = vpop.permute.xlu0 %595
    %597 = vrot.lane.b32.xlu0 %v47, 16
    %v598 = vpop.permute.xlu0 %597
    %599 = vrot.lane.b32.xlu0 %v49, 16
    %v600 = vpop.permute.xlu0 %599
    %601 = vrot.lane.b32.xlu0 %v51, 16
    %v602 = vpop.permute.xlu0 %601
    %603 = vrot.lane.b32.xlu0 %v53, 16
    %v604 = vpop.permute.xlu0 %603
    %605 = vrot.lane.b32.xlu0 %v55, 16
    %v606 = vpop.permute.xlu0 %605
    %607 = vrot.lane.b32.xlu0 %v57, 16
    %v608 = vpop.permute.xlu0 %607
    %609 = vrot.lane.b32.xlu0 %v59, 16
    %v610 = vpop.permute.xlu0 %609
    %611 = vrot.lane.b32.xlu0 %v61, 16
    %v612 = vpop.permute.xlu0 %611
    %613 = vrot.lane.b32.xlu0 %v63, 16
    %v614 = vpop.permute.xlu0 %613
    %615 = vrot.lane.b32.xlu0 %v34, 16
    %v616 = vpop.permute.xlu0 %615
    %617 = vrot.lane.b32.xlu0 %v36, 16
    %v618 = vpop.permute.xlu0 %617
    %619 = vrot.lane.b32.xlu0 %v38, 16
    %v620 = vpop.permute.xlu0 %619
    %621 = vrot.lane.b32.xlu0 %v40, 16
    %v622 = vpop.permute.xlu0 %621
    %623 = vrot.lane.b32.xlu0 %v42, 16
    %v624 = vpop.permute.xlu0 %623
    %625 = vrot.lane.b32.xlu0 %v44, 16
    %v626 = vpop.permute.xlu0 %625
    %627 = vrot.lane.b32.xlu0 %v46, 16
    %v628 = vpop.permute.xlu0 %627
    %629 = vrot.lane.b32.xlu0 %v48, 16
    %v630 = vpop.permute.xlu0 %629
    %631 = vrot.lane.b32.xlu0 %v50, 16
    %v632 = vpop.permute.xlu0 %631
    %633 = vrot.lane.b32.xlu0 %v52, 16
    %v634 = vpop.permute.xlu0 %633
    %635 = vrot.lane.b32.xlu0 %v54, 16
    %v636 = vpop.permute.xlu0 %635
    %637 = vrot.lane.b32.xlu0 %v56, 16
    %v638 = vpop.permute.xlu0 %637
    %639 = vrot.lane.b32.xlu0 %v58, 16
    %v640 = vpop.permute.xlu0 %639
    %641 = vrot.lane.b32.xlu0 %v60, 16
    %v642 = vpop.permute.xlu0 %641
    %643 = vrot.lane.b32.xlu0 %v62, 16
    %v644 = vpop.permute.xlu0 %643
    %645 = vrot.lane.b32.xlu0 %v64, 16
    %v646 = vpop.permute.xlu0 %645
    %vm647 = vcmp.lt.s32.totalorder %v130, 16
    %v648 = vsel %vm647, %v584, %v616
    %v649 = vsel %vm647, %v586, %v618
    %v650 = vsel %vm647, %v588, %v620
    %v651 = vsel %vm647, %v590, %v622
    %v652 = vsel %vm647, %v592, %v624
    %v653 = vsel %vm647, %v594, %v626
    %v654 = vsel %vm647, %v596, %v628
    %v655 = vsel %vm647, %v598, %v630
    %v656 = vsel %vm647, %v600, %v632
    %v657 = vsel %vm647, %v602, %v634
    %v658 = vsel %vm647, %v604, %v636
    %v659 = vsel %vm647, %v606, %v638
    %v660 = vsel %vm647, %v608, %v640
    %v661 = vsel %vm647, %v610, %v642
    %v662 = vsel %vm647, %v612, %v644
    %v663 = vsel %vm647, %v614, %v646
    %v664 = vsel %vm647, %v616, %v584
    %v665 = vsel %vm647, %v618, %v586
    %v666 = vsel %vm647, %v620, %v588
    %v667 = vsel %vm647, %v622, %v590
    %v668 = vsel %vm647, %v624, %v592
    %v669 = vsel %vm647, %v626, %v594
    %v670 = vsel %vm647, %v628, %v596
    %v671 = vsel %vm647, %v630, %v598
    %v672 = vsel %vm647, %v632, %v600
    %v673 = vsel %vm647, %v634, %v602
    %v674 = vsel %vm647, %v636, %v604
    %v675 = vsel %vm647, %v638, %v606
    %v676 = vsel %vm647, %v640, %v608
    %v677 = vsel %vm647, %v642, %v610
    %v678 = vsel %vm647, %v644, %v612
    %v679 = vsel %vm647, %v646, %v614
    %v680 = vmax.f32 %v33, %v664
    %v681 = vmax.f32 %v34, %v648
    %v682 = vmax.f32 %v35, %v665
    %v683 = vmax.f32 %v36, %v649
    %v684 = vmax.f32 %v37, %v666
    %v685 = vmax.f32 %v38, %v650
    %v686 = vmax.f32 %v39, %v667
    %v687 = vmax.f32 %v40, %v651
    %v688 = vmax.f32 %v41, %v668
    %v689 = vmax.f32 %v42, %v652
    %v690 = vmax.f32 %v43, %v669
    %v691 = vmax.f32 %v44, %v653
    %v692 = vmax.f32 %v45, %v670
    %v693 = vmax.f32 %v46, %v654
    %v694 = vmax.f32 %v47, %v671
    %v695 = vmax.f32 %v48, %v655
    %v696 = vmax.f32 %v49, %v672
    %v697 = vmax.f32 %v50, %v656
    %v698 = vmax.f32 %v51, %v673
    %v699 = vmax.f32 %v52, %v657
    %v700 = vmax.f32 %v53, %v674
    %v701 = vmax.f32 %v54, %v658
    %v702 = vmax.f32 %v55, %v675
    %v703 = vmax.f32 %v56, %v659
    %v704 = vmax.f32 %v57, %v676
    %v705 = vmax.f32 %v58, %v660
    %v706 = vmax.f32 %v59, %v677
    %v707 = vmax.f32 %v60, %v661
    %v708 = vmax.f32 %v61, %v678
    %v709 = vmax.f32 %v62, %v662
    %v710 = vmax.f32 %v63, %v679
    %v711 = vmax.f32 %v64, %v663
    %712 = vrot.lane.b32.xlu0 %v680, 32
    %v713 = vpop.permute.xlu0 %712
    %714 = vrot.lane.b32.xlu0 %v682, 32
    %v715 = vpop.permute.xlu0 %714
    %716 = vrot.lane.b32.xlu0 %v684, 32
    %v717 = vpop.permute.xlu0 %716
    %718 = vrot.lane.b32.xlu0 %v686, 32
    %v719 = vpop.permute.xlu0 %718
    %720 = vrot.lane.b32.xlu0 %v688, 32
    %v721 = vpop.permute.xlu0 %720
    %722 = vrot.lane.b32.xlu0 %v690, 32
    %v723 = vpop.permute.xlu0 %722
    %724 = vrot.lane.b32.xlu0 %v692, 32
    %v725 = vpop.permute.xlu0 %724
    %726 = vrot.lane.b32.xlu0 %v694, 32
    %v727 = vpop.permute.xlu0 %726
    %728 = vrot.lane.b32.xlu0 %v696, 32
    %v729 = vpop.permute.xlu0 %728
    %730 = vrot.lane.b32.xlu0 %v698, 32
    %v731 = vpop.permute.xlu0 %730
    %732 = vrot.lane.b32.xlu0 %v700, 32
    %v733 = vpop.permute.xlu0 %732
    %734 = vrot.lane.b32.xlu0 %v702, 32
    %v735 = vpop.permute.xlu0 %734
    %736 = vrot.lane.b32.xlu0 %v704, 32
    %v737 = vpop.permute.xlu0 %736
    %738 = vrot.lane.b32.xlu0 %v706, 32
    %v739 = vpop.permute.xlu0 %738
    %740 = vrot.lane.b32.xlu0 %v708, 32
    %v741 = vpop.permute.xlu0 %740
    %742 = vrot.lane.b32.xlu0 %v710, 32
    %v743 = vpop.permute.xlu0 %742
    %744 = vrot.lane.b32.xlu0 %v681, 32
    %v745 = vpop.permute.xlu0 %744
    %746 = vrot.lane.b32.xlu0 %v683, 32
    %v747 = vpop.permute.xlu0 %746
    %748 = vrot.lane.b32.xlu0 %v685, 32
    %v749 = vpop.permute.xlu0 %748
    %750 = vrot.lane.b32.xlu0 %v687, 32
    %v751 = vpop.permute.xlu0 %750
    %752 = vrot.lane.b32.xlu0 %v689, 32
    %v753 = vpop.permute.xlu0 %752
    %754 = vrot.lane.b32.xlu0 %v691, 32
    %v755 = vpop.permute.xlu0 %754
    %756 = vrot.lane.b32.xlu0 %v693, 32
    %v757 = vpop.permute.xlu0 %756
    %758 = vrot.lane.b32.xlu0 %v695, 32
    %v759 = vpop.permute.xlu0 %758
    %760 = vrot.lane.b32.xlu0 %v697, 32
    %v761 = vpop.permute.xlu0 %760
    %762 = vrot.lane.b32.xlu0 %v699, 32
    %v763 = vpop.permute.xlu0 %762
    %764 = vrot.lane.b32.xlu0 %v701, 32
    %v765 = vpop.permute.xlu0 %764
    %766 = vrot.lane.b32.xlu0 %v703, 32
    %v767 = vpop.permute.xlu0 %766
    %768 = vrot.lane.b32.xlu0 %v705, 32
    %v769 = vpop.permute.xlu0 %768
    %770 = vrot.lane.b32.xlu0 %v707, 32
    %v771 = vpop.permute.xlu0 %770
    %772 = vrot.lane.b32.xlu0 %v709, 32
    %v773 = vpop.permute.xlu0 %772
    %774 = vrot.lane.b32.xlu0 %v711, 32
    %v775 = vpop.permute.xlu0 %774
    %vm776 = vcmp.lt.s32.totalorder %v130, 32
    %v777 = vsel %vm776, %v713, %v745
    %v778 = vsel %vm776, %v715, %v747
    %v779 = vsel %vm776, %v717, %v749
    %v780 = vsel %vm776, %v719, %v751
    %v781 = vsel %vm776, %v721, %v753
    %v782 = vsel %vm776, %v723, %v755
    %v783 = vsel %vm776, %v725, %v757
    %v784 = vsel %vm776, %v727, %v759
    %v785 = vsel %vm776, %v729, %v761
    %v786 = vsel %vm776, %v731, %v763
    %v787 = vsel %vm776, %v733, %v765
    %v788 = vsel %vm776, %v735, %v767
    %v789 = vsel %vm776, %v737, %v769
    %v790 = vsel %vm776, %v739, %v771
    %v791 = vsel %vm776, %v741, %v773
    %v792 = vsel %vm776, %v743, %v775
    %v793 = vsel %vm776, %v745, %v713
    %v794 = vsel %vm776, %v747, %v715
    %v795 = vsel %vm776, %v749, %v717
    %v796 = vsel %vm776, %v751, %v719
    %v797 = vsel %vm776, %v753, %v721
    %v798 = vsel %vm776, %v755, %v723
    %v799 = vsel %vm776, %v757, %v725
    %v800 = vsel %vm776, %v759, %v727
    %v801 = vsel %vm776, %v761, %v729
    %v802 = vsel %vm776, %v763, %v731
    %v803 = vsel %vm776, %v765, %v733
    %v804 = vsel %vm776, %v767, %v735
    %v805 = vsel %vm776, %v769, %v737
    %v806 = vsel %vm776, %v771, %v739
    %v807 = vsel %vm776, %v773, %v741
    %v808 = vsel %vm776, %v775, %v743
    %v809 = vmax.f32 %v680, %v793
    %v810 = vmax.f32 %v681, %v777
    %v811 = vmax.f32 %v682, %v794
    %v812 = vmax.f32 %v683, %v778
    %v813 = vmax.f32 %v684, %v795
    %v814 = vmax.f32 %v685, %v779
    %v815 = vmax.f32 %v686, %v796
    %v816 = vmax.f32 %v687, %v780
    %v817 = vmax.f32 %v688, %v797
    %v818 = vmax.f32 %v689, %v781
    %v819 = vmax.f32 %v690, %v798
    %v820 = vmax.f32 %v691, %v782
    %v821 = vmax.f32 %v692, %v799
    %v822 = vmax.f32 %v693, %v783
    %v823 = vmax.f32 %v694, %v800
    %v824 = vmax.f32 %v695, %v784
    %v825 = vmax.f32 %v696, %v801
    %v826 = vmax.f32 %v697, %v785
    %v827 = vmax.f32 %v698, %v802
    %v828 = vmax.f32 %v699, %v786
    %v829 = vmax.f32 %v700, %v803
    %v830 = vmax.f32 %v701, %v787
    %v831 = vmax.f32 %v702, %v804
    %v832 = vmax.f32 %v703, %v788
    %v833 = vmax.f32 %v704, %v805
    %v834 = vmax.f32 %v705, %v789
    %v835 = vmax.f32 %v706, %v806
    %v836 = vmax.f32 %v707, %v790
    %v837 = vmax.f32 %v708, %v807
    %v838 = vmax.f32 %v709, %v791
    %v839 = vmax.f32 %v710, %v808
    %v840 = vmax.f32 %v711, %v792
    %841 = vrot.lane.b32.xlu0 %v809, 64
    %v842 = vpop.permute.xlu0 %841
    %843 = vrot.lane.b32.xlu0 %v811, 64
    %v844 = vpop.permute.xlu0 %843
    %845 = vrot.lane.b32.xlu0 %v813, 64
    %v846 = vpop.permute.xlu0 %845
    %847 = vrot.lane.b32.xlu0 %v815, 64
    %v848 = vpop.permute.xlu0 %847
    %849 = vrot.lane.b32.xlu0 %v817, 64
    %v850 = vpop.permute.xlu0 %849
    %851 = vrot.lane.b32.xlu0 %v819, 64
    %v852 = vpop.permute.xlu0 %851
    %853 = vrot.lane.b32.xlu0 %v821, 64
    %v854 = vpop.permute.xlu0 %853
    %855 = vrot.lane.b32.xlu0 %v823, 64
    %v856 = vpop.permute.xlu0 %855
    %857 = vrot.lane.b32.xlu0 %v825, 64
    %v858 = vpop.permute.xlu0 %857
    %859 = vrot.lane.b32.xlu0 %v827, 64
    %v860 = vpop.permute.xlu0 %859
    %861 = vrot.lane.b32.xlu0 %v829, 64
    %v862 = vpop.permute.xlu0 %861
    %863 = vrot.lane.b32.xlu0 %v831, 64
    %v864 = vpop.permute.xlu0 %863
    %865 = vrot.lane.b32.xlu0 %v833, 64
    %v866 = vpop.permute.xlu0 %865
    %867 = vrot.lane.b32.xlu0 %v835, 64
    %v868 = vpop.permute.xlu0 %867
    %869 = vrot.lane.b32.xlu0 %v837, 64
    %v870 = vpop.permute.xlu0 %869
    %871 = vrot.lane.b32.xlu0 %v839, 64
    %v872 = vpop.permute.xlu0 %871
    %873 = vrot.lane.b32.xlu0 %v810, 64
    %v874 = vpop.permute.xlu0 %873
    %875 = vrot.lane.b32.xlu0 %v812, 64
    %v876 = vpop.permute.xlu0 %875
    %877 = vrot.lane.b32.xlu0 %v814, 64
    %v878 = vpop.permute.xlu0 %877
    %879 = vrot.lane.b32.xlu0 %v816, 64
    %v880 = vpop.permute.xlu0 %879
    %881 = vrot.lane.b32.xlu0 %v818, 64
    %v882 = vpop.permute.xlu0 %881
    %883 = vrot.lane.b32.xlu0 %v820, 64
    %v884 = vpop.permute.xlu0 %883
    %885 = vrot.lane.b32.xlu0 %v822, 64
    %v886 = vpop.permute.xlu0 %885
    %887 = vrot.lane.b32.xlu0 %v824, 64
    %v888 = vpop.permute.xlu0 %887
    %889 = vrot.lane.b32.xlu0 %v826, 64
    %v890 = vpop.permute.xlu0 %889
    %891 = vrot.lane.b32.xlu0 %v828, 64
    %v892 = vpop.permute.xlu0 %891
    %893 = vrot.lane.b32.xlu0 %v830, 64
    %v894 = vpop.permute.xlu0 %893
    %895 = vrot.lane.b32.xlu0 %v832, 64
    %v896 = vpop.permute.xlu0 %895
    %897 = vrot.lane.b32.xlu0 %v834, 64
    %v898 = vpop.permute.xlu0 %897
    %899 = vrot.lane.b32.xlu0 %v836, 64
    %v900 = vpop.permute.xlu0 %899
    %901 = vrot.lane.b32.xlu0 %v838, 64
    %v902 = vpop.permute.xlu0 %901
    %903 = vrot.lane.b32.xlu0 %v840, 64
    %v904 = vpop.permute.xlu0 %903
    %vm905 = vcmp.lt.s32.totalorder %v130, 64
    %v906 = vsel %vm905, %v842, %v874
    %v907 = vsel %vm905, %v844, %v876
    %v908 = vsel %vm905, %v846, %v878
    %v909 = vsel %vm905, %v848, %v880
    %v910 = vsel %vm905, %v850, %v882
    %v911 = vsel %vm905, %v852, %v884
    %v912 = vsel %vm905, %v854, %v886
    %v913 = vsel %vm905, %v856, %v888
    %v914 = vsel %vm905, %v858, %v890
    %v915 = vsel %vm905, %v860, %v892
    %v916 = vsel %vm905, %v862, %v894
    %v917 = vsel %vm905, %v864, %v896
    %v918 = vsel %vm905, %v866, %v898
    %v919 = vsel %vm905, %v868, %v900
    %v920 = vsel %vm905, %v870, %v902
    %v921 = vsel %vm905, %v872, %v904
    %v922 = vsel %vm905, %v874, %v842
    %v923 = vsel %vm905, %v876, %v844
    %v924 = vsel %vm905, %v878, %v846
    %v925 = vsel %vm905, %v880, %v848
    %v926 = vsel %vm905, %v882, %v850
    %v927 = vsel %vm905, %v884, %v852
    %v928 = vsel %vm905, %v886, %v854
    %v929 = vsel %vm905, %v888, %v856
    %v930 = vsel %vm905, %v890, %v858
    %v931 = vsel %vm905, %v892, %v860
    %v932 = vsel %vm905, %v894, %v862
    %v933 = vsel %vm905, %v896, %v864
    %v934 = vsel %vm905, %v898, %v866
    %v935 = vsel %vm905, %v900, %v868
    %v936 = vsel %vm905, %v902, %v870
    %v937 = vsel %vm905, %v904, %v872
    %v938 = vmax.f32 %v809, %v922
    %v939 = vmax.f32 %v810, %v906
    %v940 = vmax.f32 %v811, %v923
    %v941 = vmax.f32 %v812, %v907
    %v942 = vmax.f32 %v813, %v924
    %v943 = vmax.f32 %v814, %v908
    %v944 = vmax.f32 %v815, %v925
    %v945 = vmax.f32 %v816, %v909
    %v946 = vmax.f32 %v817, %v926
    %v947 = vmax.f32 %v818, %v910
    %v948 = vmax.f32 %v819, %v927
    %v949 = vmax.f32 %v820, %v911
    %v950 = vmax.f32 %v821, %v928
    %v951 = vmax.f32 %v822, %v912
    %v952 = vmax.f32 %v823, %v929
    %v953 = vmax.f32 %v824, %v913
    %v954 = vmax.f32 %v825, %v930
    %v955 = vmax.f32 %v826, %v914
    %v956 = vmax.f32 %v827, %v931
    %v957 = vmax.f32 %v828, %v915
    %v958 = vmax.f32 %v829, %v932
    %v959 = vmax.f32 %v830, %v916
    %v960 = vmax.f32 %v831, %v933
    %v961 = vmax.f32 %v832, %v917
    %v962 = vmax.f32 %v833, %v934
    %v963 = vmax.f32 %v834, %v918
    %v964 = vmax.f32 %v835, %v935
    %v965 = vmax.f32 %v836, %v919
    %v966 = vmax.f32 %v837, %v936
    %v967 = vmax.f32 %v838, %v920
    %v968 = vmax.f32 %v839, %v937
    %v969 = vmax.f32 %v840, %v921
    %v970 = vmax.f32 %v938, %v939
    %v971 = vmax.f32 %v940, %v941
    %v972 = vmax.f32 %v942, %v943
    %v973 = vmax.f32 %v944, %v945
    %v974 = vmax.f32 %v946, %v947
    %v975 = vmax.f32 %v948, %v949
    %v976 = vmax.f32 %v950, %v951
    %v977 = vmax.f32 %v952, %v953
    %v978 = vmax.f32 %v954, %v955
    %v979 = vmax.f32 %v956, %v957
    %v980 = vmax.f32 %v958, %v959
    %v981 = vmax.f32 %v960, %v961
    %v982 = vmax.f32 %v962, %v963
    %v983 = vmax.f32 %v964, %v965
    %v984 = vmax.f32 %v966, %v967
    %v985 = vmax.f32 %v968, %v969
    %v986 = vld [vmem:[%s4] sm:$0xff]
    %v987 = vld [vmem:[%s4 + $0x8] sm:$0xff]
    %v988 = vld [vmem:[%s4 + $0x10] sm:$0xff]
    %v989 = vld [vmem:[%s4 + $0x18] sm:$0xff]
    %v990 = vld [vmem:[%s4 + $0x20] sm:$0xff]
    %v991 = vld [vmem:[%s4 + $0x28] sm:$0xff]
    %v992 = vld [vmem:[%s4 + $0x30] sm:$0xff]
    %v993 = vld [vmem:[%s4 + $0x38] sm:$0xff]
    %v994 = vld [vmem:[%s4 + $0x40] sm:$0xff]
    %v995 = vld [vmem:[%s4 + $0x48] sm:$0xff]
    %v996 = vld [vmem:[%s4 + $0x50] sm:$0xff]
    %v997 = vld [vmem:[%s4 + $0x58] sm:$0xff]
    %v998 = vld [vmem:[%s4 + $0x60] sm:$0xff]
    %v999 = vld [vmem:[%s4 + $0x68] sm:$0xff]
    %v1000 = vld [vmem:[%s4 + $0x70] sm:$0xff]
    %v1001 = vld [vmem:[%s4 + $0x78] sm:$0xff]
    %v1002 = vld [vmem:[%s4 + $0x80] sm:$0xff]
    %v1003 = vld [vmem:[%s4 + $0x88] sm:$0xff]
    %v1004 = vld [vmem:[%s4 + $0x90] sm:$0xff]
    %v1005 = vld [vmem:[%s4 + $0x98] sm:$0xff]
    %v1006 = vld [vmem:[%s4 + $0xa0] sm:$0xff]
    %v1007 = vld [vmem:[%s4 + $0xa8] sm:$0xff]
    %v1008 = vld [vmem:[%s4 + $0xb0] sm:$0xff]
    %v1009 = vld [vmem:[%s4 + $0xb8] sm:$0xff]
    %v1010 = vld [vmem:[%s4 + $0xc0] sm:$0xff]
    %v1011 = vld [vmem:[%s4 + $0xc8] sm:$0xff]
    %v1012 = vld [vmem:[%s4 + $0xd0] sm:$0xff]
    %v1013 = vld [vmem:[%s4 + $0xd8] sm:$0xff]
    %v1014 = vld [vmem:[%s4 + $0xe0] sm:$0xff]
    %v1015 = vld [vmem:[%s4 + $0xe8] sm:$0xff]
    %v1016 = vld [vmem:[%s4 + $0xf0] sm:$0xff]
    %v1017 = vld [vmem:[%s4 + $0xf8] sm:$0xff]
    %v1018 = vld [vmem:[%s5] sm:$0xff]
    %v1019 = vld [vmem:[%s5 + $0x8] sm:$0xff]
    %v1020 = vld [vmem:[%s5 + $0x10] sm:$0xff]
    %v1021 = vld [vmem:[%s5 + $0x18] sm:$0xff]
    %v1022 = vld [vmem:[%s5 + $0x20] sm:$0xff]
    %v1023 = vld [vmem:[%s5 + $0x28] sm:$0xff]
    %v1024 = vld [vmem:[%s5 + $0x30] sm:$0xff]
    %v1025 = vld [vmem:[%s5 + $0x38] sm:$0xff]
    %v1026 = vld [vmem:[%s5 + $0x40] sm:$0xff]
    %v1027 = vld [vmem:[%s5 + $0x48] sm:$0xff]
    %v1028 = vld [vmem:[%s5 + $0x50] sm:$0xff]
    %v1029 = vld [vmem:[%s5 + $0x58] sm:$0xff]
    %v1030 = vld [vmem:[%s5 + $0x60] sm:$0xff]
    %v1031 = vld [vmem:[%s5 + $0x68] sm:$0xff]
    %v1032 = vld [vmem:[%s5 + $0x70] sm:$0xff]
    %v1033 = vld [vmem:[%s5 + $0x78] sm:$0xff]
    %v1034 = vld [vmem:[%s5 + $0x80] sm:$0xff]
    %v1035 = vld [vmem:[%s5 + $0x88] sm:$0xff]
    %v1036 = vld [vmem:[%s5 + $0x90] sm:$0xff]
    %v1037 = vld [vmem:[%s5 + $0x98] sm:$0xff]
    %v1038 = vld [vmem:[%s5 + $0xa0] sm:$0xff]
    %v1039 = vld [vmem:[%s5 + $0xa8] sm:$0xff]
    %v1040 = vld [vmem:[%s5 + $0xb0] sm:$0xff]
    %v1041 = vld [vmem:[%s5 + $0xb8] sm:$0xff]
    %v1042 = vld [vmem:[%s5 + $0xc0] sm:$0xff]
    %v1043 = vld [vmem:[%s5 + $0xc8] sm:$0xff]
    %v1044 = vld [vmem:[%s5 + $0xd0] sm:$0xff]
    %v1045 = vld [vmem:[%s5 + $0xd8] sm:$0xff]
    %v1046 = vld [vmem:[%s5 + $0xe0] sm:$0xff]
    %v1047 = vld [vmem:[%s5 + $0xe8] sm:$0xff]
    %v1048 = vld [vmem:[%s5 + $0xf0] sm:$0xff]
    %v1049 = vld [vmem:[%s5 + $0xf8] sm:$0xff]
    %1050 = vmatprep.subr.mxu0 0.0
    %1051 = vmatpush1.msra.mxu0 %v1033
    %1052 = vmatprep.subr.mxu0 0.0
    %1053 = vmatpush1.msra.mxu0 %v1032
    %1054 = vmatprep.subr.mxu0 0.0
    %1055 = vmatpush1.msra.mxu0 %v1031
    %1056 = vmatprep.subr.mxu0 0.0
    %1057 = vmatpush1.msra.mxu0 %v1030
    %1058 = vmatprep.subr.mxu0 0.0
    %1059 = vmatpush1.msra.mxu0 %v1029
    %1060 = vmatprep.subr.mxu0 0.0
    %1061 = vmatpush1.msra.mxu0 %v1028
    %1062 = vmatprep.subr.mxu0 0.0
    %1063 = vmatpush1.msra.mxu0 %v1027
    %1064 = vmatprep.subr.mxu0 0.0
    %1065 = vmatpush1.msra.mxu0 %v1026
    %1066 = vmatprep.subr.mxu0 0.0
    %1067 = vmatpush1.msra.mxu0 %v1025
    %1068 = vmatprep.subr.mxu0 0.0
    %1069 = vmatpush1.msra.mxu0 %v1024
    %1070 = vmatprep.subr.mxu0 0.0
    %1071 = vmatpush1.msra.mxu0 %v1023
    %1072 = vmatprep.subr.mxu0 0.0
    %1073 = vmatpush1.msra.mxu0 %v1022
    %1074 = vmatprep.subr.mxu0 0.0
    %1075 = vmatpush1.msra.mxu0 %v1021
    %1076 = vmatprep.subr.mxu0 0.0
    %1077 = vmatpush1.msra.mxu0 %v1020
    %1078 = vmatprep.subr.mxu0 0.0
    %1079 = vmatpush1.msra.mxu0 %v1019
    %1080 = vmatprep.subr.mxu0 0.0
    %1081 = vmatpush1.msra.mxu0 %v1018
    %1082 = vmatprep.subr.mxu0 0.0
    %1083 = vmatpush2.msra.mxu0 %v1049
    %1084 = vmatprep.subr.mxu0 0.0
    %1085 = vmatpush2.msra.mxu0 %v1048
    %1086 = vmatprep.subr.mxu0 0.0
    %1087 = vmatpush2.msra.mxu0 %v1047
    %1088 = vmatprep.subr.mxu0 0.0
    %1089 = vmatpush2.msra.mxu0 %v1046
    %1090 = vmatprep.subr.mxu0 0.0
    %1091 = vmatpush2.msra.mxu0 %v1045
    %1092 = vmatprep.subr.mxu0 0.0
    %1093 = vmatpush2.msra.mxu0 %v1044
    %1094 = vmatprep.subr.mxu0 0.0
    %1095 = vmatpush2.msra.mxu0 %v1043
    %1096 = vmatprep.subr.mxu0 0.0
    %1097 = vmatpush2.msra.mxu0 %v1042
    %1098 = vmatprep.subr.mxu0 0.0
    %1099 = vmatpush2.msra.mxu0 %v1041
    %1100 = vmatprep.subr.mxu0 0.0
    %1101 = vmatpush2.msra.mxu0 %v1040
    %1102 = vmatprep.subr.mxu0 0.0
    %1103 = vmatpush2.msra.mxu0 %v1039
    %1104 = vmatprep.subr.mxu0 0.0
    %1105 = vmatpush2.msra.mxu0 %v1038
    %1106 = vmatprep.subr.mxu0 0.0
    %1107 = vmatpush2.msra.mxu0 %v1037
    %1108 = vmatprep.subr.mxu0 0.0
    %1109 = vmatpush2.msra.mxu0 %v1036
    %1110 = vmatprep.subr.mxu0 0.0
    %1111 = vmatpush2.msra.mxu0 %v1035
    %1112 = vmatprep.subr.mxu0 0.0
    %1113 = vmatpush2.msra.mxu0 %v1034
    %1114 = vmatprep.mubr.f32.mxu0 %v970
    %1115 = vmatmul.mubr.f32.gmra.mxu0 %v970
    %v1116 = vpop.f32.mrf.mxu0
    %v1117 = vadd.f32 0.0, %v1116
    %v1118 = vpop.f32.mrf.mxu0
    %1119 = vmatprep.mubr.f32.mxu0 %v971
    %1120 = vmatmul.mubr.f32.gmra.mxu0 %v971
    %v1121 = vpop.f32.mrf.mxu0
    %v1122 = vadd.f32 0.0, %v1121
    %v1123 = vpop.f32.mrf.mxu0
    %1124 = vmatprep.mubr.f32.mxu0 %v972
    %1125 = vmatmul.mubr.f32.gmra.mxu0 %v972
    %v1126 = vpop.f32.mrf.mxu0
    %v1127 = vadd.f32 0.0, %v1126
    %v1128 = vpop.f32.mrf.mxu0
    %1129 = vmatprep.mubr.f32.mxu0 %v973
    %1130 = vmatmul.mubr.f32.gmra.mxu0 %v973
    %v1131 = vpop.f32.mrf.mxu0
    %v1132 = vadd.f32 0.0, %v1131
    %v1133 = vpop.f32.mrf.mxu0
    %1134 = vmatprep.mubr.f32.mxu0 %v974
    %1135 = vmatmul.mubr.f32.gmra.mxu0 %v974
    %v1136 = vpop.f32.mrf.mxu0
    %v1137 = vadd.f32 0.0, %v1136
    %v1138 = vpop.f32.mrf.mxu0
    %1139 = vmatprep.mubr.f32.mxu0 %v975
    %1140 = vmatmul.mubr.f32.gmra.mxu0 %v975
    %v1141 = vpop.f32.mrf.mxu0
    %v1142 = vadd.f32 0.0, %v1141
    %v1143 = vpop.f32.mrf.mxu0
    %1144 = vmatprep.mubr.f32.mxu0 %v976
    %1145 = vmatmul.mubr.f32.gmra.mxu0 %v976
    %v1146 = vpop.f32.mrf.mxu0
    %v1147 = vadd.f32 0.0, %v1146
    %v1148 = vpop.f32.mrf.mxu0
    %1149 = vmatprep.mubr.f32.mxu0 %v977
    %1150 = vmatmul.mubr.f32.gmra.mxu0 %v977
    %v1151 = vpop.f32.mrf.mxu0
    %v1152 = vadd.f32 0.0, %v1151
    %v1153 = vpop.f32.mrf.mxu0
    %1154 = vmatprep.mubr.f32.mxu0 %v978
    %1155 = vmatmul.mubr.f32.gmra.mxu0 %v978
    %v1156 = vpop.f32.mrf.mxu0
    %v1157 = vadd.f32 0.0, %v1156
    %v1158 = vpop.f32.mrf.mxu0
    %1159 = vmatprep.mubr.f32.mxu0 %v979
    %1160 = vmatmul.mubr.f32.gmra.mxu0 %v979
    %v1161 = vpop.f32.mrf.mxu0
    %v1162 = vadd.f32 0.0, %v1161
    %v1163 = vpop.f32.mrf.mxu0
    %1164 = vmatprep.mubr.f32.mxu0 %v980
    %1165 = vmatmul.mubr.f32.gmra.mxu0 %v980
    %v1166 = vpop.f32.mrf.mxu0
    %v1167 = vadd.f32 0.0, %v1166
    %v1168 = vpop.f32.mrf.mxu0
    %1169 = vmatprep.mubr.f32.mxu0 %v981
    %1170 = vmatmul.mubr.f32.gmra.mxu0 %v981
    %v1171 = vpop.f32.mrf.mxu0
    %v1172 = vadd.f32 0.0, %v1171
    %v1173 = vpop.f32.mrf.mxu0
    %1174 = vmatprep.mubr.f32.mxu0 %v982
    %1175 = vmatmul.mubr.f32.gmra.mxu0 %v982
    %v1176 = vpop.f32.mrf.mxu0
    %v1177 = vadd.f32 0.0, %v1176
    %v1178 = vpop.f32.mrf.mxu0
    %1179 = vmatprep.mubr.f32.mxu0 %v983
    %1180 = vmatmul.mubr.f32.gmra.mxu0 %v983
    %v1181 = vpop.f32.mrf.mxu0
    %v1182 = vadd.f32 0.0, %v1181
    %v1183 = vpop.f32.mrf.mxu0
    %1184 = vmatprep.mubr.f32.mxu0 %v984
    %1185 = vmatmul.mubr.f32.gmra.mxu0 %v984
    %v1186 = vpop.f32.mrf.mxu0
    %v1187 = vadd.f32 0.0, %v1186
    %v1188 = vpop.f32.mrf.mxu0
    %1189 = vmatprep.mubr.f32.mxu0 %v985
    %1190 = vmatmul.mubr.f32.gmra.mxu0 %v985
    %v1191 = vpop.f32.mrf.mxu0
    %v1192 = vadd.f32 0.0, %v1191
    %v1193 = vpop.f32.mrf.mxu0
    %1194 = vdwg.mxu0
    %1195 = vmatprep.subr.mxu0 0.0
    %1196 = vmatpush1.msra.mxu0 %v1001
    %1197 = vmatprep.subr.mxu0 0.0
    %1198 = vmatpush1.msra.mxu0 %v1000
    %1199 = vmatprep.subr.mxu0 0.0
    %1200 = vmatpush1.msra.mxu0 %v999
    %1201 = vmatprep.subr.mxu0 0.0
    %1202 = vmatpush1.msra.mxu0 %v998
    %1203 = vmatprep.subr.mxu0 0.0
    %1204 = vmatpush1.msra.mxu0 %v997
    %1205 = vmatprep.subr.mxu0 0.0
    %1206 = vmatpush1.msra.mxu0 %v996
    %1207 = vmatprep.subr.mxu0 0.0
    %1208 = vmatpush1.msra.mxu0 %v995
    %1209 = vmatprep.subr.mxu0 0.0
    %1210 = vmatpush1.msra.mxu0 %v994
    %1211 = vmatprep.subr.mxu0 0.0
    %1212 = vmatpush1.msra.mxu0 %v993
    %1213 = vmatprep.subr.mxu0 0.0
    %1214 = vmatpush1.msra.mxu0 %v992
    %1215 = vmatprep.subr.mxu0 0.0
    %1216 = vmatpush1.msra.mxu0 %v991
    %1217 = vmatprep.subr.mxu0 0.0
    %1218 = vmatpush1.msra.mxu0 %v990
    %1219 = vmatprep.subr.mxu0 0.0
    %1220 = vmatpush1.msra.mxu0 %v989
    %1221 = vmatprep.subr.mxu0 0.0
    %1222 = vmatpush1.msra.mxu0 %v988
    %1223 = vmatprep.subr.mxu0 0.0
    %1224 = vmatpush1.msra.mxu0 %v987
    %1225 = vmatprep.subr.mxu0 0.0
    %1226 = vmatpush1.msra.mxu0 %v986
    %1227 = vmatprep.subr.mxu0 0.0
    %1228 = vmatpush2.msra.mxu0 %v1017
    %1229 = vmatprep.subr.mxu0 0.0
    %1230 = vmatpush2.msra.mxu0 %v1016
    %1231 = vmatprep.subr.mxu0 0.0
    %1232 = vmatpush2.msra.mxu0 %v1015
    %1233 = vmatprep.subr.mxu0 0.0
    %1234 = vmatpush2.msra.mxu0 %v1014
    %1235 = vmatprep.subr.mxu0 0.0
    %1236 = vmatpush2.msra.mxu0 %v1013
    %1237 = vmatprep.subr.mxu0 0.0
    %1238 = vmatpush2.msra.mxu0 %v1012
    %1239 = vmatprep.subr.mxu0 0.0
    %1240 = vmatpush2.msra.mxu0 %v1011
    %1241 = vmatprep.subr.mxu0 0.0
    %1242 = vmatpush2.msra.mxu0 %v1010
    %1243 = vmatprep.subr.mxu0 0.0
    %1244 = vmatpush2.msra.mxu0 %v1009
    %1245 = vmatprep.subr.mxu0 0.0
    %1246 = vmatpush2.msra.mxu0 %v1008
    %1247 = vmatprep.subr.mxu0 0.0
    %1248 = vmatpush2.msra.mxu0 %v1007
    %1249 = vmatprep.subr.mxu0 0.0
    %1250 = vmatpush2.msra.mxu0 %v1006
    %1251 = vmatprep.subr.mxu0 0.0
    %1252 = vmatpush2.msra.mxu0 %v1005
    %1253 = vmatprep.subr.mxu0 0.0
    %1254 = vmatpush2.msra.mxu0 %v1004
    %1255 = vmatprep.subr.mxu0 0.0
    %1256 = vmatpush2.msra.mxu0 %v1003
    %1257 = vmatprep.subr.mxu0 0.0
    %1258 = vmatpush2.msra.mxu0 %v1002
    %1259 = vmatprep.mubr.f32.mxu0 %v552
    %1260 = vmatmul.mubr.f32.gmra.mxu0 %v551
    %v1261 = vpop.f32.mrf.mxu0
    %v1262 = vadd.f32 %v1117, %v1261
    %v1263 = vpop.f32.mrf.mxu0
    %1264 = vmatprep.mubr.f32.mxu0 %v554
    %1265 = vmatmul.mubr.f32.gmra.mxu0 %v553
    %v1266 = vpop.f32.mrf.mxu0
    %v1267 = vadd.f32 %v1122, %v1266
    %v1268 = vpop.f32.mrf.mxu0
    %1269 = vmatprep.mubr.f32.mxu0 %v556
    %1270 = vmatmul.mubr.f32.gmra.mxu0 %v555
    %v1271 = vpop.f32.mrf.mxu0
    %v1272 = vadd.f32 %v1127, %v1271
    %v1273 = vpop.f32.mrf.mxu0
    %1274 = vmatprep.mubr.f32.mxu0 %v558
    %1275 = vmatmul.mubr.f32.gmra.mxu0 %v557
    %v1276 = vpop.f32.mrf.mxu0
    %v1277 = vadd.f32 %v1132, %v1276
    %v1278 = vpop.f32.mrf.mxu0
    %1279 = vmatprep.mubr.f32.mxu0 %v560
    %1280 = vmatmul.mubr.f32.gmra.mxu0 %v559
    %v1281 = vpop.f32.mrf.mxu0
    %v1282 = vadd.f32 %v1137, %v1281
    %v1283 = vpop.f32.mrf.mxu0
    %1284 = vmatprep.mubr.f32.mxu0 %v562
    %1285 = vmatmul.mubr.f32.gmra.mxu0 %v561
    %v1286 = vpop.f32.mrf.mxu0
    %v1287 = vadd.f32 %v1142, %v1286
    %v1288 = vpop.f32.mrf.mxu0
    %1289 = vmatprep.mubr.f32.mxu0 %v564
    %1290 = vmatmul.mubr.f32.gmra.mxu0 %v563
    %v1291 = vpop.f32.mrf.mxu0
    %v1292 = vadd.f32 %v1147, %v1291
    %v1293 = vpop.f32.mrf.mxu0
    %1294 = vmatprep.mubr.f32.mxu0 %v566
    %1295 = vmatmul.mubr.f32.gmra.mxu0 %v565
    %v1296 = vpop.f32.mrf.mxu0
    %v1297 = vadd.f32 %v1152, %v1296
    %v1298 = vpop.f32.mrf.mxu0
    %1299 = vmatprep.mubr.f32.mxu0 %v568
    %1300 = vmatmul.mubr.f32.gmra.mxu0 %v567
    %v1301 = vpop.f32.mrf.mxu0
    %v1302 = vadd.f32 %v1157, %v1301
    %v1303 = vpop.f32.mrf.mxu0
    %1304 = vmatprep.mubr.f32.mxu0 %v570
    %1305 = vmatmul.mubr.f32.gmra.mxu0 %v569
    %v1306 = vpop.f32.mrf.mxu0
    %v1307 = vadd.f32 %v1162, %v1306
    %v1308 = vpop.f32.mrf.mxu0
    %1309 = vmatprep.mubr.f32.mxu0 %v572
    %1310 = vmatmul.mubr.f32.gmra.mxu0 %v571
    %v1311 = vpop.f32.mrf.mxu0
    %v1312 = vadd.f32 %v1167, %v1311
    %v1313 = vpop.f32.mrf.mxu0
    %1314 = vmatprep.mubr.f32.mxu0 %v574
    %1315 = vmatmul.mubr.f32.gmra.mxu0 %v573
    %v1316 = vpop.f32.mrf.mxu0
    %v1317 = vadd.f32 %v1172, %v1316
    %v1318 = vpop.f32.mrf.mxu0
    %1319 = vmatprep.mubr.f32.mxu0 %v576
    %1320 = vmatmul.mubr.f32.gmra.mxu0 %v575
    %v1321 = vpop.f32.mrf.mxu0
    %v1322 = vadd.f32 %v1177, %v1321
    %v1323 = vpop.f32.mrf.mxu0
    %1324 = vmatprep.mubr.f32.mxu0 %v578
    %1325 = vmatmul.mubr.f32.gmra.mxu0 %v577
    %v1326 = vpop.f32.mrf.mxu0
    %v1327 = vadd.f32 %v1182, %v1326
    %v1328 = vpop.f32.mrf.mxu0
    %1329 = vmatprep.mubr.f32.mxu0 %v580
    %1330 = vmatmul.mubr.f32.gmra.mxu0 %v579
    %v1331 = vpop.f32.mrf.mxu0
    %v1332 = vadd.f32 %v1187, %v1331
    %v1333 = vpop.f32.mrf.mxu0
    %1334 = vmatprep.mubr.f32.mxu0 %v582
    %1335 = vmatmul.mubr.f32.gmra.mxu0 %v581
    %v1336 = vpop.f32.mrf.mxu0
    %v1337 = vadd.f32 %v1192, %v1336
    %v1338 = vpop.f32.mrf.mxu0
    %1339 = vdwg.mxu0
    %v1340 = vld [vmem:[%s6] sm:$0xff]
    %v1341 = vld [vmem:[%s6 + $0x8] sm:$0xff]
    %v1342 = vld [vmem:[%s6 + $0x10] sm:$0xff]
    %v1343 = vld [vmem:[%s6 + $0x18] sm:$0xff]
    %v1344 = vld [vmem:[%s6 + $0x20] sm:$0xff]
    %v1345 = vld [vmem:[%s6 + $0x28] sm:$0xff]
    %v1346 = vld [vmem:[%s6 + $0x30] sm:$0xff]
    %v1347 = vld [vmem:[%s6 + $0x38] sm:$0xff]
    %v1348 = vld [vmem:[%s6 + $0x40] sm:$0xff]
    %v1349 = vld [vmem:[%s6 + $0x48] sm:$0xff]
    %v1350 = vld [vmem:[%s6 + $0x50] sm:$0xff]
    %v1351 = vld [vmem:[%s6 + $0x58] sm:$0xff]
    %v1352 = vld [vmem:[%s6 + $0x60] sm:$0xff]
    %v1353 = vld [vmem:[%s6 + $0x68] sm:$0xff]
    %v1354 = vld [vmem:[%s6 + $0x70] sm:$0xff]
    %v1355 = vld [vmem:[%s6 + $0x78] sm:$0xff]
    %v1356 = vld [vmem:[%s6 + $0x80] sm:$0xff]
    %v1357 = vld [vmem:[%s6 + $0x88] sm:$0xff]
    %v1358 = vld [vmem:[%s6 + $0x90] sm:$0xff]
    %v1359 = vld [vmem:[%s6 + $0x98] sm:$0xff]
    %v1360 = vld [vmem:[%s6 + $0xa0] sm:$0xff]
    %v1361 = vld [vmem:[%s6 + $0xa8] sm:$0xff]
    %v1362 = vld [vmem:[%s6 + $0xb0] sm:$0xff]
    %v1363 = vld [vmem:[%s6 + $0xb8] sm:$0xff]
    %v1364 = vld [vmem:[%s6 + $0xc0] sm:$0xff]
    %v1365 = vld [vmem:[%s6 + $0xc8] sm:$0xff]
    %v1366 = vld [vmem:[%s6 + $0xd0] sm:$0xff]
    %v1367 = vld [vmem:[%s6 + $0xd8] sm:$0xff]
    %v1368 = vld [vmem:[%s6 + $0xe0] sm:$0xff]
    %v1369 = vld [vmem:[%s6 + $0xe8] sm:$0xff]
    %v1370 = vld [vmem:[%s6 + $0xf0] sm:$0xff]
    %v1371 = vld [vmem:[%s6 + $0xf8] sm:$0xff]
    %1372 = vmatprep.subr.mxu0 0.0
    %1373 = vmatpush1.msra.mxu0 %v1355
    %1374 = vmatprep.subr.mxu0 0.0
    %1375 = vmatpush1.msra.mxu0 %v1354
    %1376 = vmatprep.subr.mxu0 0.0
    %1377 = vmatpush1.msra.mxu0 %v1353
    %1378 = vmatprep.subr.mxu0 0.0
    %1379 = vmatpush1.msra.mxu0 %v1352
    %1380 = vmatprep.subr.mxu0 0.0
    %1381 = vmatpush1.msra.mxu0 %v1351
    %1382 = vmatprep.subr.mxu0 0.0
    %1383 = vmatpush1.msra.mxu0 %v1350
    %1384 = vmatprep.subr.mxu0 0.0
    %1385 = vmatpush1.msra.mxu0 %v1349
    %1386 = vmatprep.subr.mxu0 0.0
    %1387 = vmatpush1.msra.mxu0 %v1348
    %1388 = vmatprep.subr.mxu0 0.0
    %1389 = vmatpush1.msra.mxu0 %v1347
    %1390 = vmatprep.subr.mxu0 0.0
    %1391 = vmatpush1.msra.mxu0 %v1346
    %1392 = vmatprep.subr.mxu0 0.0
    %1393 = vmatpush1.msra.mxu0 %v1345
    %1394 = vmatprep.subr.mxu0 0.0
    %1395 = vmatpush1.msra.mxu0 %v1344
    %1396 = vmatprep.subr.mxu0 0.0
    %1397 = vmatpush1.msra.mxu0 %v1343
    %1398 = vmatprep.subr.mxu0 0.0
    %1399 = vmatpush1.msra.mxu0 %v1342
    %1400 = vmatprep.subr.mxu0 0.0
    %1401 = vmatpush1.msra.mxu0 %v1341
    %1402 = vmatprep.subr.mxu0 0.0
    %1403 = vmatpush1.msra.mxu0 %v1340
    %1404 = vmatprep.subr.mxu0 0.0
    %1405 = vmatpush2.msra.mxu0 %v1371
    %1406 = vmatprep.subr.mxu0 0.0
    %1407 = vmatpush2.msra.mxu0 %v1370
    %1408 = vmatprep.subr.mxu0 0.0
    %1409 = vmatpush2.msra.mxu0 %v1369
    %1410 = vmatprep.subr.mxu0 0.0
    %1411 = vmatpush2.msra.mxu0 %v1368
    %1412 = vmatprep.subr.mxu0 0.0
    %1413 = vmatpush2.msra.mxu0 %v1367
    %1414 = vmatprep.subr.mxu0 0.0
    %1415 = vmatpush2.msra.mxu0 %v1366
    %1416 = vmatprep.subr.mxu0 0.0
    %1417 = vmatpush2.msra.mxu0 %v1365
    %1418 = vmatprep.subr.mxu0 0.0
    %1419 = vmatpush2.msra.mxu0 %v1364
    %1420 = vmatprep.subr.mxu0 0.0
    %1421 = vmatpush2.msra.mxu0 %v1363
    %1422 = vmatprep.subr.mxu0 0.0
    %1423 = vmatpush2.msra.mxu0 %v1362
    %1424 = vmatprep.subr.mxu0 0.0
    %1425 = vmatpush2.msra.mxu0 %v1361
    %1426 = vmatprep.subr.mxu0 0.0
    %1427 = vmatpush2.msra.mxu0 %v1360
    %1428 = vmatprep.subr.mxu0 0.0
    %1429 = vmatpush2.msra.mxu0 %v1359
    %1430 = vmatprep.subr.mxu0 0.0
    %1431 = vmatpush2.msra.mxu0 %v1358
    %1432 = vmatprep.subr.mxu0 0.0
    %1433 = vmatpush2.msra.mxu0 %v1357
    %1434 = vmatprep.subr.mxu0 0.0
    %1435 = vmatpush2.msra.mxu0 %v1356
    %1436 = vmatprep.mubr.f32.mxu0 %v34
    %1437 = vmatmul.mubr.f32.gmra.mxu0 %v33
    %v1438 = vpop.f32.mrf.mxu0
    %v1439 = vadd.f32 0.0, %v1438
    %v1440 = vpop.f32.mrf.mxu0
    %1441 = vmatprep.mubr.f32.mxu0 %v36
    %1442 = vmatmul.mubr.f32.gmra.mxu0 %v35
    %v1443 = vpop.f32.mrf.mxu0
    %v1444 = vadd.f32 0.0, %v1443
    %v1445 = vpop.f32.mrf.mxu0
    %1446 = vmatprep.mubr.f32.mxu0 %v38
    %1447 = vmatmul.mubr.f32.gmra.mxu0 %v37
    %v1448 = vpop.f32.mrf.mxu0
    %v1449 = vadd.f32 0.0, %v1448
    %v1450 = vpop.f32.mrf.mxu0
    %1451 = vmatprep.mubr.f32.mxu0 %v40
    %1452 = vmatmul.mubr.f32.gmra.mxu0 %v39
    %v1453 = vpop.f32.mrf.mxu0
    %v1454 = vadd.f32 0.0, %v1453
    %v1455 = vpop.f32.mrf.mxu0
    %1456 = vmatprep.mubr.f32.mxu0 %v42
    %1457 = vmatmul.mubr.f32.gmra.mxu0 %v41
    %v1458 = vpop.f32.mrf.mxu0
    %v1459 = vadd.f32 0.0, %v1458
    %v1460 = vpop.f32.mrf.mxu0
    %1461 = vmatprep.mubr.f32.mxu0 %v44
    %1462 = vmatmul.mubr.f32.gmra.mxu0 %v43
    %v1463 = vpop.f32.mrf.mxu0
    %v1464 = vadd.f32 0.0, %v1463
    %v1465 = vpop.f32.mrf.mxu0
    %1466 = vmatprep.mubr.f32.mxu0 %v46
    %1467 = vmatmul.mubr.f32.gmra.mxu0 %v45
    %v1468 = vpop.f32.mrf.mxu0
    %v1469 = vadd.f32 0.0, %v1468
    %v1470 = vpop.f32.mrf.mxu0
    %1471 = vmatprep.mubr.f32.mxu0 %v48
    %1472 = vmatmul.mubr.f32.gmra.mxu0 %v47
    %v1473 = vpop.f32.mrf.mxu0
    %v1474 = vadd.f32 0.0, %v1473
    %v1475 = vpop.f32.mrf.mxu0
    %1476 = vmatprep.mubr.f32.mxu0 %v50
    %1477 = vmatmul.mubr.f32.gmra.mxu0 %v49
    %v1478 = vpop.f32.mrf.mxu0
    %v1479 = vadd.f32 0.0, %v1478
    %v1480 = vpop.f32.mrf.mxu0
    %1481 = vmatprep.mubr.f32.mxu0 %v52
    %1482 = vmatmul.mubr.f32.gmra.mxu0 %v51
    %v1483 = vpop.f32.mrf.mxu0
    %v1484 = vadd.f32 0.0, %v1483
    %v1485 = vpop.f32.mrf.mxu0
    %1486 = vmatprep.mubr.f32.mxu0 %v54
    %1487 = vmatmul.mubr.f32.gmra.mxu0 %v53
    %v1488 = vpop.f32.mrf.mxu0
    %v1489 = vadd.f32 0.0, %v1488
    %v1490 = vpop.f32.mrf.mxu0
    %1491 = vmatprep.mubr.f32.mxu0 %v56
    %1492 = vmatmul.mubr.f32.gmra.mxu0 %v55
    %v1493 = vpop.f32.mrf.mxu0
    %v1494 = vadd.f32 0.0, %v1493
    %v1495 = vpop.f32.mrf.mxu0
    %1496 = vmatprep.mubr.f32.mxu0 %v58
    %1497 = vmatmul.mubr.f32.gmra.mxu0 %v57
    %v1498 = vpop.f32.mrf.mxu0
    %v1499 = vadd.f32 0.0, %v1498
    %v1500 = vpop.f32.mrf.mxu0
    %1501 = vmatprep.mubr.f32.mxu0 %v60
    %1502 = vmatmul.mubr.f32.gmra.mxu0 %v59
    %v1503 = vpop.f32.mrf.mxu0
    %v1504 = vadd.f32 0.0, %v1503
    %v1505 = vpop.f32.mrf.mxu0
    %1506 = vmatprep.mubr.f32.mxu0 %v62
    %1507 = vmatmul.mubr.f32.gmra.mxu0 %v61
    %v1508 = vpop.f32.mrf.mxu0
    %v1509 = vadd.f32 0.0, %v1508
    %v1510 = vpop.f32.mrf.mxu0
    %1511 = vmatprep.mubr.f32.mxu0 %v64
    %1512 = vmatmul.mubr.f32.gmra.mxu0 %v63
    %v1513 = vpop.f32.mrf.mxu0
    %v1514 = vadd.f32 0.0, %v1513
    %v1515 = vpop.f32.mrf.mxu0
    %1516 = vdwg.mxu0
    %v1517 = vadd.f32 %v1262, %v1439
    %v1518 = vadd.f32 %v1267, %v1444
    %v1519 = vadd.f32 %v1272, %v1449
    %v1520 = vadd.f32 %v1277, %v1454
    %v1521 = vadd.f32 %v1282, %v1459
    %v1522 = vadd.f32 %v1287, %v1464
    %v1523 = vadd.f32 %v1292, %v1469
    %v1524 = vadd.f32 %v1297, %v1474
    %v1525 = vadd.f32 %v1302, %v1479
    %v1526 = vadd.f32 %v1307, %v1484
    %v1527 = vadd.f32 %v1312, %v1489
    %v1528 = vadd.f32 %v1317, %v1494
    %v1529 = vadd.f32 %v1322, %v1499
    %v1530 = vadd.f32 %v1327, %v1504
    %v1531 = vadd.f32 %v1332, %v1509
    %v1532 = vadd.f32 %v1337, %v1514
    %v1533 = vld [vmem:[%s1] sm:$0xff]
    %v1534 = vld [vmem:[%s3] sm:$0xff]
    %1536 = vset.pattern.permute.xlu0 0
    %1537 = vperm.xlu0 %1536, %v1534
    %v1538 = vpop.permute.xlu0 %1537
    %1540 = vmatprep.subr.mxu0 0.0
    %1541 = vmatpush1.msra.mxu0 %v1532
    %1542 = vmatprep.subr.mxu0 0.0
    %1543 = vmatpush1.msra.mxu0 %v1531
    %1544 = vmatprep.subr.mxu0 0.0
    %1545 = vmatpush1.msra.mxu0 %v1530
    %1546 = vmatprep.subr.mxu0 0.0
    %1547 = vmatpush1.msra.mxu0 %v1529
    %1548 = vmatprep.subr.mxu0 0.0
    %1549 = vmatpush1.msra.mxu0 %v1528
    %1550 = vmatprep.subr.mxu0 0.0
    %1551 = vmatpush1.msra.mxu0 %v1527
    %1552 = vmatprep.subr.mxu0 0.0
    %1553 = vmatpush1.msra.mxu0 %v1526
    %1554 = vmatprep.subr.mxu0 0.0
    %1555 = vmatpush1.msra.mxu0 %v1525
    %1556 = vmatprep.subr.mxu0 0.0
    %1557 = vmatpush1.msra.mxu0 %v1524
    %1558 = vmatprep.subr.mxu0 0.0
    %1559 = vmatpush1.msra.mxu0 %v1523
    %1560 = vmatprep.subr.mxu0 0.0
    %1561 = vmatpush1.msra.mxu0 %v1522
    %1562 = vmatprep.subr.mxu0 0.0
    %1563 = vmatpush1.msra.mxu0 %v1521
    %1564 = vmatprep.subr.mxu0 0.0
    %1565 = vmatpush1.msra.mxu0 %v1520
    %1566 = vmatprep.subr.mxu0 0.0
    %1567 = vmatpush1.msra.mxu0 %v1519
    %1568 = vmatprep.subr.mxu0 0.0
    %1569 = vmatpush1.msra.mxu0 %v1518
    %1570 = vmatprep.subr.mxu0 0.0
    %1571 = vmatpush1.msra.mxu0 %v1517
    %1572 = vmatprep.subr.mxu0 0.0
    %1573 = vmatpush2.msra.mxu0 0.0
    %1574 = vmatprep.subr.mxu0 0.0
    %1575 = vmatpush2.msra.mxu0 0.0
    %1576 = vmatprep.subr.mxu0 0.0
    %1577 = vmatpush2.msra.mxu0 0.0
    %1578 = vmatprep.subr.mxu0 0.0
    %1579 = vmatpush2.msra.mxu0 0.0
    %1580 = vmatprep.subr.mxu0 0.0
    %1581 = vmatpush2.msra.mxu0 0.0
    %1582 = vmatprep.subr.mxu0 0.0
    %1583 = vmatpush2.msra.mxu0 0.0
    %1584 = vmatprep.subr.mxu0 0.0
    %1585 = vmatpush2.msra.mxu0 0.0
    %1586 = vmatprep.subr.mxu0 0.0
    %1587 = vmatpush2.msra.mxu0 0.0
    %1588 = vmatprep.subr.mxu0 0.0
    %1589 = vmatpush2.msra.mxu0 0.0
    %1590 = vmatprep.subr.mxu0 0.0
    %1591 = vmatpush2.msra.mxu0 0.0
    %1592 = vmatprep.subr.mxu0 0.0
    %1593 = vmatpush2.msra.mxu0 0.0
    %1594 = vmatprep.subr.mxu0 0.0
    %1595 = vmatpush2.msra.mxu0 0.0
    %1596 = vmatprep.subr.mxu0 0.0
    %1597 = vmatpush2.msra.mxu0 0.0
    %1598 = vmatprep.subr.mxu0 0.0
    %1599 = vmatpush2.msra.mxu0 0.0
    %1600 = vmatprep.subr.mxu0 0.0
    %1601 = vmatpush2.msra.mxu0 0.0
    %1602 = vmatprep.subr.mxu0 0.0
    %1603 = vmatpush2.msra.mxu0 0.0
    %1604 = vmatprep.mubr.f32.mxu0 0.0
    %1605 = vmatmul.mubr.f32.gmra.mxu0 %v1533
    %v1606 = vpop.f32.mrf.mxu0
    %v1607 = vadd.f32 %v1538, %v1606
    %v1608 = vpop.f32.mrf.mxu0
    %1609 = vdwg.mxu0
    %v1610 = vmax.f32 %v1607, 0.0
    %v1611 = vld [vmem:[%s2] sm:$0xff]
    %v1612 = vld [vmem:[%s2 + $0x8] sm:$0xff]
    %v1613 = vld [vmem:[%s2 + $0x10] sm:$0xff]
    %v1614 = vld [vmem:[%s2 + $0x18] sm:$0xff]
    %v1615 = vld [vmem:[%s2 + $0x20] sm:$0xff]
    %v1616 = vld [vmem:[%s2 + $0x28] sm:$0xff]
    %v1617 = vld [vmem:[%s2 + $0x30] sm:$0xff]
    %v1618 = vld [vmem:[%s2 + $0x38] sm:$0xff]
    %v1619 = vld [vmem:[%s2 + $0x40] sm:$0xff]
    %v1620 = vld [vmem:[%s2 + $0x48] sm:$0xff]
    %v1621 = vld [vmem:[%s2 + $0x50] sm:$0xff]
    %v1622 = vld [vmem:[%s2 + $0x58] sm:$0xff]
    %v1623 = vld [vmem:[%s2 + $0x60] sm:$0xff]
    %v1624 = vld [vmem:[%s2 + $0x68] sm:$0xff]
    %v1625 = vld [vmem:[%s2 + $0x70] sm:$0xff]
    %v1626 = vld [vmem:[%s2 + $0x78] sm:$0xff]
    %vm1627 = vcmask 64512
    %v1629 = vsel %vm1627, %v1611, 0
    %v1632 = vsel %vm1627, %v1612, 0
    %v1635 = vsel %vm1627, %v1613, 0
    %v1638 = vsel %vm1627, %v1614, 0
    %v1641 = vsel %vm1627, %v1615, 0
    %v1644 = vsel %vm1627, %v1616, 0
    %v1647 = vsel %vm1627, %v1617, 0
    %v1650 = vsel %vm1627, %v1618, 0
    %v1653 = vsel %vm1627, %v1619, 0
    %v1656 = vsel %vm1627, %v1620, 0
    %v1659 = vsel %vm1627, %v1621, 0
    %v1662 = vsel %vm1627, %v1622, 0
    %v1665 = vsel %vm1627, %v1623, 0
    %v1668 = vsel %vm1627, %v1624, 0
    %v1671 = vsel %vm1627, %v1625, 0
    %v1674 = vsel %vm1627, %v1626, 0
    %1676 = vmatprep.subr.mxu0 0.0
    %1677 = vmatpush1.msra.mxu0 0.0
    %1678 = vmatprep.subr.mxu0 0.0
    %1679 = vmatpush1.msra.mxu0 0.0
    %1680 = vmatprep.subr.mxu0 0.0
    %1681 = vmatpush1.msra.mxu0 0.0
    %1682 = vmatprep.subr.mxu0 0.0
    %1683 = vmatpush1.msra.mxu0 0.0
    %1684 = vmatprep.subr.mxu0 0.0
    %1685 = vmatpush1.msra.mxu0 0.0
    %1686 = vmatprep.subr.mxu0 0.0
    %1687 = vmatpush1.msra.mxu0 0.0
    %1688 = vmatprep.subr.mxu0 0.0
    %1689 = vmatpush1.msra.mxu0 0.0
    %1690 = vmatprep.subr.mxu0 0.0
    %1691 = vmatpush1.msra.mxu0 0.0
    %1692 = vmatprep.subr.mxu0 0.0
    %1693 = vmatpush1.msra.mxu0 0.0
    %1694 = vmatprep.subr.mxu0 0.0
    %1695 = vmatpush1.msra.mxu0 0.0
    %1696 = vmatprep.subr.mxu0 0.0
    %1697 = vmatpush1.msra.mxu0 0.0
    %1698 = vmatprep.subr.mxu0 0.0
    %1699 = vmatpush1.msra.mxu0 0.0
    %1700 = vmatprep.subr.mxu0 0.0
    %1701 = vmatpush1.msra.mxu0 0.0
    %1702 = vmatprep.subr.mxu0 0.0
    %1703 = vmatpush1.msra.mxu0 0.0
    %1704 = vmatprep.subr.mxu0 0.0
    %1705 = vmatpush1.msra.mxu0 0.0
    %1706 = vmatprep.subr.mxu0 0.0
    %1707 = vmatpush1.msra.mxu0 %v1610
    %1708 = vmatprep.subr.mxu0 0.0
    %1709 = vmatpush2.msra.mxu0 0.0
    %1710 = vmatprep.subr.mxu0 0.0
    %1711 = vmatpush2.msra.mxu0 0.0
    %1712 = vmatprep.subr.mxu0 0.0
    %1713 = vmatpush2.msra.mxu0 0.0
    %1714 = vmatprep.subr.mxu0 0.0
    %1715 = vmatpush2.msra.mxu0 0.0
    %1716 = vmatprep.subr.mxu0 0.0
    %1717 = vmatpush2.msra.mxu0 0.0
    %1718 = vmatprep.subr.mxu0 0.0
    %1719 = vmatpush2.msra.mxu0 0.0
    %1720 = vmatprep.subr.mxu0 0.0
    %1721 = vmatpush2.msra.mxu0 0.0
    %1722 = vmatprep.subr.mxu0 0.0
    %1723 = vmatpush2.msra.mxu0 0.0
    %1724 = vmatprep.subr.mxu0 0.0
    %1725 = vmatpush2.msra.mxu0 0.0
    %1726 = vmatprep.subr.mxu0 0.0
    %1727 = vmatpush2.msra.mxu0 0.0
    %1728 = vmatprep.subr.mxu0 0.0
    %1729 = vmatpush2.msra.mxu0 0.0
    %1730 = vmatprep.subr.mxu0 0.0
    %1731 = vmatpush2.msra.mxu0 0.0
    %1732 = vmatprep.subr.mxu0 0.0
    %1733 = vmatpush2.msra.mxu0 0.0
    %1734 = vmatprep.subr.mxu0 0.0
    %1735 = vmatpush2.msra.mxu0 0.0
    %1736 = vmatprep.subr.mxu0 0.0
    %1737 = vmatpush2.msra.mxu0 0.0
    %1738 = vmatprep.subr.mxu0 0.0
    %1739 = vmatpush2.msra.mxu0 0.0
    %1740 = vmatprep.mubr.f32.mxu0 0.0
    %1741 = vmatmul.mubr.f32.gmra.mxu0 %v1629
    %v1742 = vpop.f32.mrf.mxu0
    %v1743 = vadd.f32 0.0, %v1742
    %v1744 = vpop.f32.mrf.mxu0
    %1745 = vmatprep.mubr.f32.mxu0 0.0
    %1746 = vmatmul.mubr.f32.gmra.mxu0 %v1632
    %v1747 = vpop.f32.mrf.mxu0
    %v1748 = vadd.f32 0.0, %v1747
    %v1749 = vpop.f32.mrf.mxu0
    %1750 = vmatprep.mubr.f32.mxu0 0.0
    %1751 = vmatmul.mubr.f32.gmra.mxu0 %v1635
    %v1752 = vpop.f32.mrf.mxu0
    %v1753 = vadd.f32 0.0, %v1752
    %v1754 = vpop.f32.mrf.mxu0
    %1755 = vmatprep.mubr.f32.mxu0 0.0
    %1756 = vmatmul.mubr.f32.gmra.mxu0 %v1638
    %v1757 = vpop.f32.mrf.mxu0
    %v1758 = vadd.f32 0.0, %v1757
    %v1759 = vpop.f32.mrf.mxu0
    %1760 = vmatprep.mubr.f32.mxu0 0.0
    %1761 = vmatmul.mubr.f32.gmra.mxu0 %v1641
    %v1762 = vpop.f32.mrf.mxu0
    %v1763 = vadd.f32 0.0, %v1762
    %v1764 = vpop.f32.mrf.mxu0
    %1765 = vmatprep.mubr.f32.mxu0 0.0
    %1766 = vmatmul.mubr.f32.gmra.mxu0 %v1644
    %v1767 = vpop.f32.mrf.mxu0
    %v1768 = vadd.f32 0.0, %v1767
    %v1769 = vpop.f32.mrf.mxu0
    %1770 = vmatprep.mubr.f32.mxu0 0.0
    %1771 = vmatmul.mubr.f32.gmra.mxu0 %v1647
    %v1772 = vpop.f32.mrf.mxu0
    %v1773 = vadd.f32 0.0, %v1772
    %v1774 = vpop.f32.mrf.mxu0
    %1775 = vmatprep.mubr.f32.mxu0 0.0
    %1776 = vmatmul.mubr.f32.gmra.mxu0 %v1650
    %v1777 = vpop.f32.mrf.mxu0
    %v1778 = vadd.f32 0.0, %v1777
    %v1779 = vpop.f32.mrf.mxu0
    %1780 = vmatprep.mubr.f32.mxu0 0.0
    %1781 = vmatmul.mubr.f32.gmra.mxu0 %v1653
    %v1782 = vpop.f32.mrf.mxu0
    %v1783 = vadd.f32 0.0, %v1782
    %v1784 = vpop.f32.mrf.mxu0
    %1785 = vmatprep.mubr.f32.mxu0 0.0
    %1786 = vmatmul.mubr.f32.gmra.mxu0 %v1656
    %v1787 = vpop.f32.mrf.mxu0
    %v1788 = vadd.f32 0.0, %v1787
    %v1789 = vpop.f32.mrf.mxu0
    %1790 = vmatprep.mubr.f32.mxu0 0.0
    %1791 = vmatmul.mubr.f32.gmra.mxu0 %v1659
    %v1792 = vpop.f32.mrf.mxu0
    %v1793 = vadd.f32 0.0, %v1792
    %v1794 = vpop.f32.mrf.mxu0
    %1795 = vmatprep.mubr.f32.mxu0 0.0
    %1796 = vmatmul.mubr.f32.gmra.mxu0 %v1662
    %v1797 = vpop.f32.mrf.mxu0
    %v1798 = vadd.f32 0.0, %v1797
    %v1799 = vpop.f32.mrf.mxu0
    %1800 = vmatprep.mubr.f32.mxu0 0.0
    %1801 = vmatmul.mubr.f32.gmra.mxu0 %v1665
    %v1802 = vpop.f32.mrf.mxu0
    %v1803 = vadd.f32 0.0, %v1802
    %v1804 = vpop.f32.mrf.mxu0
    %1805 = vmatprep.mubr.f32.mxu0 0.0
    %1806 = vmatmul.mubr.f32.gmra.mxu0 %v1668
    %v1807 = vpop.f32.mrf.mxu0
    %v1808 = vadd.f32 0.0, %v1807
    %v1809 = vpop.f32.mrf.mxu0
    %1810 = vmatprep.mubr.f32.mxu0 0.0
    %1811 = vmatmul.mubr.f32.gmra.mxu0 %v1671
    %v1812 = vpop.f32.mrf.mxu0
    %v1813 = vadd.f32 0.0, %v1812
    %v1814 = vpop.f32.mrf.mxu0
    %1815 = vmatprep.mubr.f32.mxu0 0.0
    %1816 = vmatmul.mubr.f32.gmra.mxu0 %v1674
    %v1817 = vpop.f32.mrf.mxu0
    %v1818 = vadd.f32 0.0, %v1817
    %v1819 = vpop.f32.mrf.mxu0
    %1820 = vdwg.mxu0
    %v1821 = vxor.u32 %v1743, 2147483648
    %v1822 = vxor.u32 %v1748, 2147483648
    %v1823 = vxor.u32 %v1753, 2147483648
    %v1824 = vxor.u32 %v1758, 2147483648
    %v1825 = vxor.u32 %v1763, 2147483648
    %v1826 = vxor.u32 %v1768, 2147483648
    %v1827 = vxor.u32 %v1773, 2147483648
    %v1828 = vxor.u32 %v1778, 2147483648
    %v1829 = vxor.u32 %v1783, 2147483648
    %v1830 = vxor.u32 %v1788, 2147483648
    %v1831 = vxor.u32 %v1793, 2147483648
    %v1832 = vxor.u32 %v1798, 2147483648
    %v1833 = vxor.u32 %v1803, 2147483648
    %v1834 = vxor.u32 %v1808, 2147483648
    %v1835 = vxor.u32 %v1813, 2147483648
    %v1836 = vxor.u32 %v1818, 2147483648
    %v1837 = vmul.f32 %v1821, 1.442695
    %v1838 = vpow.pop %v1837
    %v1839 = vmul.f32 %v1822, 1.442695
    %v1840 = vpow.pop %v1839
    %v1841 = vmul.f32 %v1823, 1.442695
    %v1842 = vpow.pop %v1841
    %v1843 = vmul.f32 %v1824, 1.442695
    %v1844 = vpow.pop %v1843
    %v1845 = vmul.f32 %v1825, 1.442695
    %v1846 = vpow.pop %v1845
    %v1847 = vmul.f32 %v1826, 1.442695
    %v1848 = vpow.pop %v1847
    %v1849 = vmul.f32 %v1827, 1.442695
    %v1850 = vpow.pop %v1849
    %v1851 = vmul.f32 %v1828, 1.442695
    %v1852 = vpow.pop %v1851
    %v1853 = vmul.f32 %v1829, 1.442695
    %v1854 = vpow.pop %v1853
    %v1855 = vmul.f32 %v1830, 1.442695
    %v1856 = vpow.pop %v1855
    %v1857 = vmul.f32 %v1831, 1.442695
    %v1858 = vpow.pop %v1857
    %v1859 = vmul.f32 %v1832, 1.442695
    %v1860 = vpow.pop %v1859
    %v1861 = vmul.f32 %v1833, 1.442695
    %v1862 = vpow.pop %v1861
    %v1863 = vmul.f32 %v1834, 1.442695
    %v1864 = vpow.pop %v1863
    %v1865 = vmul.f32 %v1835, 1.442695
    %v1866 = vpow.pop %v1865
    %v1867 = vmul.f32 %v1836, 1.442695
    %v1868 = vpow.pop %v1867
    %v1869 = vadd.f32 %v1838, 1.0
    %v1870 = vadd.f32 %v1840, 1.0
    %v1871 = vadd.f32 %v1842, 1.0
    %v1872 = vadd.f32 %v1844, 1.0
    %v1873 = vadd.f32 %v1846, 1.0
    %v1874 = vadd.f32 %v1848, 1.0
    %v1875 = vadd.f32 %v1850, 1.0
    %v1876 = vadd.f32 %v1852, 1.0
    %v1877 = vadd.f32 %v1854, 1.0
    %v1878 = vadd.f32 %v1856, 1.0
    %v1879 = vadd.f32 %v1858, 1.0
    %v1880 = vadd.f32 %v1860, 1.0
    %v1881 = vadd.f32 %v1862, 1.0
    %v1882 = vadd.f32 %v1864, 1.0
    %v1883 = vadd.f32 %v1866, 1.0
    %v1884 = vadd.f32 %v1868, 1.0
    %v1885 = vrcp.pop %v1869
    %v1886 = vmul.f32 1.0, %v1885
    %v1887 = vrcp.pop %v1870
    %v1888 = vmul.f32 1.0, %v1887
    %v1889 = vrcp.pop %v1871
    %v1890 = vmul.f32 1.0, %v1889
    %v1891 = vrcp.pop %v1872
    %v1892 = vmul.f32 1.0, %v1891
    %v1893 = vrcp.pop %v1873
    %v1894 = vmul.f32 1.0, %v1893
    %v1895 = vrcp.pop %v1874
    %v1896 = vmul.f32 1.0, %v1895
    %v1897 = vrcp.pop %v1875
    %v1898 = vmul.f32 1.0, %v1897
    %v1899 = vrcp.pop %v1876
    %v1900 = vmul.f32 1.0, %v1899
    %v1901 = vrcp.pop %v1877
    %v1902 = vmul.f32 1.0, %v1901
    %v1903 = vrcp.pop %v1878
    %v1904 = vmul.f32 1.0, %v1903
    %v1905 = vrcp.pop %v1879
    %v1906 = vmul.f32 1.0, %v1905
    %v1907 = vrcp.pop %v1880
    %v1908 = vmul.f32 1.0, %v1907
    %v1909 = vrcp.pop %v1881
    %v1910 = vmul.f32 1.0, %v1909
    %v1911 = vrcp.pop %v1882
    %v1912 = vmul.f32 1.0, %v1911
    %v1913 = vrcp.pop %v1883
    %v1914 = vmul.f32 1.0, %v1913
    %v1915 = vrcp.pop %v1884
    %v1916 = vmul.f32 1.0, %v1915
    %1918 = vset.pattern.permute.xlu0 32
    %1919 = vperm.xlu0 %1918, %v1886
    %v1920 = vpop.permute.xlu0 %1919
    %1923 = vset.pattern.permute.xlu0 32
    %1924 = vperm.xlu0 %1923, %v1888
    %v1925 = vpop.permute.xlu0 %1924
    %1928 = vset.pattern.permute.xlu0 32
    %1929 = vperm.xlu0 %1928, %v1890
    %v1930 = vpop.permute.xlu0 %1929
    %1933 = vset.pattern.permute.xlu0 32
    %1934 = vperm.xlu0 %1933, %v1892
    %v1935 = vpop.permute.xlu0 %1934
    %1938 = vset.pattern.permute.xlu0 32
    %1939 = vperm.xlu0 %1938, %v1894
    %v1940 = vpop.permute.xlu0 %1939
    %1943 = vset.pattern.permute.xlu0 32
    %1944 = vperm.xlu0 %1943, %v1896
    %v1945 = vpop.permute.xlu0 %1944
    %1948 = vset.pattern.permute.xlu0 32
    %1949 = vperm.xlu0 %1948, %v1898
    %v1950 = vpop.permute.xlu0 %1949
    %1953 = vset.pattern.permute.xlu0 32
    %1954 = vperm.xlu0 %1953, %v1900
    %v1955 = vpop.permute.xlu0 %1954
    %1958 = vset.pattern.permute.xlu0 32
    %1959 = vperm.xlu0 %1958, %v1902
    %v1960 = vpop.permute.xlu0 %1959
    %1963 = vset.pattern.permute.xlu0 32
    %1964 = vperm.xlu0 %1963, %v1904
    %v1965 = vpop.permute.xlu0 %1964
    %1968 = vset.pattern.permute.xlu0 32
    %1969 = vperm.xlu0 %1968, %v1906
    %v1970 = vpop.permute.xlu0 %1969
    %1973 = vset.pattern.permute.xlu0 32
    %1974 = vperm.xlu0 %1973, %v1908
    %v1975 = vpop.permute.xlu0 %1974
    %1978 = vset.pattern.permute.xlu0 32
    %1979 = vperm.xlu0 %1978, %v1910
    %v1980 = vpop.permute.xlu0 %1979
    %1983 = vset.pattern.permute.xlu0 32
    %1984 = vperm.xlu0 %1983, %v1912
    %v1985 = vpop.permute.xlu0 %1984
    %1988 = vset.pattern.permute.xlu0 32
    %1989 = vperm.xlu0 %1988, %v1914
    %v1990 = vpop.permute.xlu0 %1989
    %1993 = vset.pattern.permute.xlu0 32
    %1994 = vperm.xlu0 %1993, %v1916
    %v1995 = vpop.permute.xlu0 %1994
    %v1997 = vmul.f32 %v1886, %v1920
    %v1998 = vmul.f32 %v1888, %v1925
    %v1999 = vmul.f32 %v1890, %v1930
    %v2000 = vmul.f32 %v1892, %v1935
    %v2001 = vmul.f32 %v1894, %v1940
    %v2002 = vmul.f32 %v1896, %v1945
    %v2003 = vmul.f32 %v1898, %v1950
    %v2004 = vmul.f32 %v1900, %v1955
    %v2005 = vmul.f32 %v1902, %v1960
    %v2006 = vmul.f32 %v1904, %v1965
    %v2007 = vmul.f32 %v1906, %v1970
    %v2008 = vmul.f32 %v1908, %v1975
    %v2009 = vmul.f32 %v1910, %v1980
    %v2010 = vmul.f32 %v1912, %v1985
    %v2011 = vmul.f32 %v1914, %v1990
    %v2012 = vmul.f32 %v1916, %v1995
    %v2013 = vld [vmem:[%s7] sm:$0xff]
    %v2014 = vld [vmem:[%s7 + $0x8] sm:$0xff]
    %v2015 = vld [vmem:[%s7 + $0x10] sm:$0xff]
    %v2016 = vld [vmem:[%s7 + $0x18] sm:$0xff]
    %vm2017 = vcmask 130048
    %v2019 = vsel %vm2017, %v1997, 0
    %v2022 = vsel %vm2017, %v1998, 0
    %v2025 = vsel %vm2017, %v1999, 0
    %v2028 = vsel %vm2017, %v2000, 0
    %v2031 = vsel %vm2017, %v2001, 0
    %v2034 = vsel %vm2017, %v2002, 0
    %v2037 = vsel %vm2017, %v2003, 0
    %v2040 = vsel %vm2017, %v2004, 0
    %v2043 = vsel %vm2017, %v2005, 0
    %v2046 = vsel %vm2017, %v2006, 0
    %v2049 = vsel %vm2017, %v2007, 0
    %v2052 = vsel %vm2017, %v2008, 0
    %v2055 = vsel %vm2017, %v2009, 0
    %v2058 = vsel %vm2017, %v2010, 0
    %v2061 = vsel %vm2017, %v2011, 0
    %v2064 = vsel %vm2017, %v2012, 0
    %2066 = vmatprep.subr.mxu0 0.0
    %2067 = vmatpush1.msra.mxu0 0.0
    %2068 = vmatprep.subr.mxu0 0.0
    %2069 = vmatpush1.msra.mxu0 0.0
    %2070 = vmatprep.subr.mxu0 0.0
    %2071 = vmatpush1.msra.mxu0 0.0
    %2072 = vmatprep.subr.mxu0 0.0
    %2073 = vmatpush1.msra.mxu0 0.0
    %2074 = vmatprep.subr.mxu0 0.0
    %2075 = vmatpush1.msra.mxu0 0.0
    %2076 = vmatprep.subr.mxu0 0.0
    %2077 = vmatpush1.msra.mxu0 0.0
    %2078 = vmatprep.subr.mxu0 0.0
    %2079 = vmatpush1.msra.mxu0 0.0
    %2080 = vmatprep.subr.mxu0 0.0
    %2081 = vmatpush1.msra.mxu0 0.0
    %2082 = vmatprep.subr.mxu0 0.0
    %2083 = vmatpush1.msra.mxu0 0.0
    %2084 = vmatprep.subr.mxu0 0.0
    %2085 = vmatpush1.msra.mxu0 0.0
    %2086 = vmatprep.subr.mxu0 0.0
    %2087 = vmatpush1.msra.mxu0 0.0
    %2088 = vmatprep.subr.mxu0 0.0
    %2089 = vmatpush1.msra.mxu0 0.0
    %2090 = vmatprep.subr.mxu0 0.0
    %2091 = vmatpush1.msra.mxu0 0.0
    %2092 = vmatprep.subr.mxu0 0.0
    %2093 = vmatpush1.msra.mxu0 0.0
    %2094 = vmatprep.subr.mxu0 %v2016
    %2095 = vmatpush1.msra.mxu0 %v2015
    %2096 = vmatprep.subr.mxu0 %v2014
    %2097 = vmatpush1.msra.mxu0 %v2013
    %2098 = vmatprep.subr.mxu0 0.0
    %2099 = vmatpush2.msra.mxu0 0.0
    %2100 = vmatprep.subr.mxu0 0.0
    %2101 = vmatpush2.msra.mxu0 0.0
    %2102 = vmatprep.subr.mxu0 0.0
    %2103 = vmatpush2.msra.mxu0 0.0
    %2104 = vmatprep.subr.mxu0 0.0
    %2105 = vmatpush2.msra.mxu0 0.0
    %2106 = vmatprep.subr.mxu0 0.0
    %2107 = vmatpush2.msra.mxu0 0.0
    %2108 = vmatprep.subr.mxu0 0.0
    %2109 = vmatpush2.msra.mxu0 0.0
    %2110 = vmatprep.subr.mxu0 0.0
    %2111 = vmatpush2.msra.mxu0 0.0
    %2112 = vmatprep.subr.mxu0 0.0
    %2113 = vmatpush2.msra.mxu0 0.0
    %2114 = vmatprep.subr.mxu0 0.0
    %2115 = vmatpush2.msra.mxu0 0.0
    %2116 = vmatprep.subr.mxu0 0.0
    %2117 = vmatpush2.msra.mxu0 0.0
    %2118 = vmatprep.subr.mxu0 0.0
    %2119 = vmatpush2.msra.mxu0 0.0
    %2120 = vmatprep.subr.mxu0 0.0
    %2121 = vmatpush2.msra.mxu0 0.0
    %2122 = vmatprep.subr.mxu0 0.0
    %2123 = vmatpush2.msra.mxu0 0.0
    %2124 = vmatprep.subr.mxu0 0.0
    %2125 = vmatpush2.msra.mxu0 0.0
    %2126 = vmatprep.subr.mxu0 0.0
    %2127 = vmatpush2.msra.mxu0 0.0
    %2128 = vmatprep.subr.mxu0 0.0
    %2129 = vmatpush2.msra.mxu0 0.0
    %2130 = vmatprep.mubr.f32.mxu0 0.0
    %2131 = vmatmul.mubr.f32.gmra.mxu0 %v2019
    %v2132 = vpop.f32.mrf.mxu0
    %v2133 = vadd.f32 0.0, %v2132
    %v2134 = vpop.f32.mrf.mxu0
    %v2135 = vadd.f32 0.0, %v2134
    %2136 = vmatprep.mubr.f32.mxu0 0.0
    %2137 = vmatmul.mubr.f32.gmra.mxu0 %v2022
    %v2138 = vpop.f32.mrf.mxu0
    %v2139 = vadd.f32 0.0, %v2138
    %v2140 = vpop.f32.mrf.mxu0
    %v2141 = vadd.f32 0.0, %v2140
    %2142 = vmatprep.mubr.f32.mxu0 0.0
    %2143 = vmatmul.mubr.f32.gmra.mxu0 %v2025
    %v2144 = vpop.f32.mrf.mxu0
    %v2145 = vadd.f32 0.0, %v2144
    %v2146 = vpop.f32.mrf.mxu0
    %v2147 = vadd.f32 0.0, %v2146
    %2148 = vmatprep.mubr.f32.mxu0 0.0
    %2149 = vmatmul.mubr.f32.gmra.mxu0 %v2028
    %v2150 = vpop.f32.mrf.mxu0
    %v2151 = vadd.f32 0.0, %v2150
    %v2152 = vpop.f32.mrf.mxu0
    %v2153 = vadd.f32 0.0, %v2152
    %2154 = vmatprep.mubr.f32.mxu0 0.0
    %2155 = vmatmul.mubr.f32.gmra.mxu0 %v2031
    %v2156 = vpop.f32.mrf.mxu0
    %v2157 = vadd.f32 0.0, %v2156
    %v2158 = vpop.f32.mrf.mxu0
    %v2159 = vadd.f32 0.0, %v2158
    %2160 = vmatprep.mubr.f32.mxu0 0.0
    %2161 = vmatmul.mubr.f32.gmra.mxu0 %v2034
    %v2162 = vpop.f32.mrf.mxu0
    %v2163 = vadd.f32 0.0, %v2162
    %v2164 = vpop.f32.mrf.mxu0
    %v2165 = vadd.f32 0.0, %v2164
    %2166 = vmatprep.mubr.f32.mxu0 0.0
    %2167 = vmatmul.mubr.f32.gmra.mxu0 %v2037
    %v2168 = vpop.f32.mrf.mxu0
    %v2169 = vadd.f32 0.0, %v2168
    %v2170 = vpop.f32.mrf.mxu0
    %v2171 = vadd.f32 0.0, %v2170
    %2172 = vmatprep.mubr.f32.mxu0 0.0
    %2173 = vmatmul.mubr.f32.gmra.mxu0 %v2040
    %v2174 = vpop.f32.mrf.mxu0
    %v2175 = vadd.f32 0.0, %v2174
    %v2176 = vpop.f32.mrf.mxu0
    %v2177 = vadd.f32 0.0, %v2176
    %2178 = vmatprep.mubr.f32.mxu0 0.0
    %2179 = vmatmul.mubr.f32.gmra.mxu0 %v2043
    %v2180 = vpop.f32.mrf.mxu0
    %v2181 = vadd.f32 0.0, %v2180
    %v2182 = vpop.f32.mrf.mxu0
    %v2183 = vadd.f32 0.0, %v2182
    %2184 = vmatprep.mubr.f32.mxu0 0.0
    %2185 = vmatmul.mubr.f32.gmra.mxu0 %v2046
    %v2186 = vpop.f32.mrf.mxu0
    %v2187 = vadd.f32 0.0, %v2186
    %v2188 = vpop.f32.mrf.mxu0
    %v2189 = vadd.f32 0.0, %v2188
    %2190 = vmatprep.mubr.f32.mxu0 0.0
    %2191 = vmatmul.mubr.f32.gmra.mxu0 %v2049
    %v2192 = vpop.f32.mrf.mxu0
    %v2193 = vadd.f32 0.0, %v2192
    %v2194 = vpop.f32.mrf.mxu0
    %v2195 = vadd.f32 0.0, %v2194
    %2196 = vmatprep.mubr.f32.mxu0 0.0
    %2197 = vmatmul.mubr.f32.gmra.mxu0 %v2052
    %v2198 = vpop.f32.mrf.mxu0
    %v2199 = vadd.f32 0.0, %v2198
    %v2200 = vpop.f32.mrf.mxu0
    %v2201 = vadd.f32 0.0, %v2200
    %2202 = vmatprep.mubr.f32.mxu0 0.0
    %2203 = vmatmul.mubr.f32.gmra.mxu0 %v2055
    %v2204 = vpop.f32.mrf.mxu0
    %v2205 = vadd.f32 0.0, %v2204
    %v2206 = vpop.f32.mrf.mxu0
    %v2207 = vadd.f32 0.0, %v2206
    %2208 = vmatprep.mubr.f32.mxu0 0.0
    %2209 = vmatmul.mubr.f32.gmra.mxu0 %v2058
    %v2210 = vpop.f32.mrf.mxu0
    %v2211 = vadd.f32 0.0, %v2210
    %v2212 = vpop.f32.mrf.mxu0
    %v2213 = vadd.f32 0.0, %v2212
    %2214 = vmatprep.mubr.f32.mxu0 0.0
    %2215 = vmatmul.mubr.f32.gmra.mxu0 %v2061
    %v2216 = vpop.f32.mrf.mxu0
    %v2217 = vadd.f32 0.0, %v2216
    %v2218 = vpop.f32.mrf.mxu0
    %v2219 = vadd.f32 0.0, %v2218
    %2220 = vmatprep.mubr.f32.mxu0 0.0
    %2221 = vmatmul.mubr.f32.gmra.mxu0 %v2064
    %v2222 = vpop.f32.mrf.mxu0
    %v2223 = vadd.f32 0.0, %v2222
    %v2224 = vpop.f32.mrf.mxu0
    %v2225 = vadd.f32 0.0, %v2224
    %2226 = vdwg.mxu0
    %v2227 = vld [vmem:[%s8] sm:$0xff]
    %v2228 = vld [vmem:[%s8 + $0x8] sm:$0xff]
    %v2229 = vld [vmem:[%s8 + $0x10] sm:$0xff]
    %v2230 = vld [vmem:[%s8 + $0x18] sm:$0xff]
    %2231 = vrot.lane.b32.xlu0 %v1886, 112
    %v2232 = vpop.permute.xlu0 %2231
    %2233 = vrot.lane.b32.xlu0 %v1888, 112
    %v2234 = vpop.permute.xlu0 %2233
    %2235 = vrot.lane.b32.xlu0 %v1890, 112
    %v2236 = vpop.permute.xlu0 %2235
    %2237 = vrot.lane.b32.xlu0 %v1892, 112
    %v2238 = vpop.permute.xlu0 %2237
    %2239 = vrot.lane.b32.xlu0 %v1894, 112
    %v2240 = vpop.permute.xlu0 %2239
    %2241 = vrot.lane.b32.xlu0 %v1896, 112
    %v2242 = vpop.permute.xlu0 %2241
    %2243 = vrot.lane.b32.xlu0 %v1898, 112
    %v2244 = vpop.permute.xlu0 %2243
    %2245 = vrot.lane.b32.xlu0 %v1900, 112
    %v2246 = vpop.permute.xlu0 %2245
    %2247 = vrot.lane.b32.xlu0 %v1902, 112
    %v2248 = vpop.permute.xlu0 %2247
    %2249 = vrot.lane.b32.xlu0 %v1904, 112
    %v2250 = vpop.permute.xlu0 %2249
    %2251 = vrot.lane.b32.xlu0 %v1906, 112
    %v2252 = vpop.permute.xlu0 %2251
    %2253 = vrot.lane.b32.xlu0 %v1908, 112
    %v2254 = vpop.permute.xlu0 %2253
    %2255 = vrot.lane.b32.xlu0 %v1910, 112
    %v2256 = vpop.permute.xlu0 %2255
    %2257 = vrot.lane.b32.xlu0 %v1912, 112
    %v2258 = vpop.permute.xlu0 %2257
    %2259 = vrot.lane.b32.xlu0 %v1914, 112
    %v2260 = vpop.permute.xlu0 %2259
    %2261 = vrot.lane.b32.xlu0 %v1916, 112
    %v2262 = vpop.permute.xlu0 %2261
    %v2263 = vsel %vm2017, %v2232, 0
    %v2265 = vsel %vm2017, %v2234, 0
    %v2267 = vsel %vm2017, %v2236, 0
    %v2269 = vsel %vm2017, %v2238, 0
    %v2271 = vsel %vm2017, %v2240, 0
    %v2273 = vsel %vm2017, %v2242, 0
    %v2275 = vsel %vm2017, %v2244, 0
    %v2277 = vsel %vm2017, %v2246, 0
    %v2279 = vsel %vm2017, %v2248, 0
    %v2281 = vsel %vm2017, %v2250, 0
    %v2283 = vsel %vm2017, %v2252, 0
    %v2285 = vsel %vm2017, %v2254, 0
    %v2287 = vsel %vm2017, %v2256, 0
    %v2289 = vsel %vm2017, %v2258, 0
    %v2291 = vsel %vm2017, %v2260, 0
    %v2293 = vsel %vm2017, %v2262, 0
    %2295 = vmatprep.subr.mxu0 0.0
    %2296 = vmatpush1.msra.mxu0 0.0
    %2297 = vmatprep.subr.mxu0 0.0
    %2298 = vmatpush1.msra.mxu0 0.0
    %2299 = vmatprep.subr.mxu0 0.0
    %2300 = vmatpush1.msra.mxu0 0.0
    %2301 = vmatprep.subr.mxu0 0.0
    %2302 = vmatpush1.msra.mxu0 0.0
    %2303 = vmatprep.subr.mxu0 0.0
    %2304 = vmatpush1.msra.mxu0 0.0
    %2305 = vmatprep.subr.mxu0 0.0
    %2306 = vmatpush1.msra.mxu0 0.0
    %2307 = vmatprep.subr.mxu0 0.0
    %2308 = vmatpush1.msra.mxu0 0.0
    %2309 = vmatprep.subr.mxu0 0.0
    %2310 = vmatpush1.msra.mxu0 0.0
    %2311 = vmatprep.subr.mxu0 0.0
    %2312 = vmatpush1.msra.mxu0 0.0
    %2313 = vmatprep.subr.mxu0 0.0
    %2314 = vmatpush1.msra.mxu0 0.0
    %2315 = vmatprep.subr.mxu0 0.0
    %2316 = vmatpush1.msra.mxu0 0.0
    %2317 = vmatprep.subr.mxu0 0.0
    %2318 = vmatpush1.msra.mxu0 0.0
    %2319 = vmatprep.subr.mxu0 0.0
    %2320 = vmatpush1.msra.mxu0 0.0
    %2321 = vmatprep.subr.mxu0 0.0
    %2322 = vmatpush1.msra.mxu0 0.0
    %2323 = vmatprep.subr.mxu0 %v2230
    %2324 = vmatpush1.msra.mxu0 %v2229
    %2325 = vmatprep.subr.mxu0 %v2228
    %2326 = vmatpush1.msra.mxu0 %v2227
    %2327 = vmatprep.subr.mxu0 0.0
    %2328 = vmatpush2.msra.mxu0 0.0
    %2329 = vmatprep.subr.mxu0 0.0
    %2330 = vmatpush2.msra.mxu0 0.0
    %2331 = vmatprep.subr.mxu0 0.0
    %2332 = vmatpush2.msra.mxu0 0.0
    %2333 = vmatprep.subr.mxu0 0.0
    %2334 = vmatpush2.msra.mxu0 0.0
    %2335 = vmatprep.subr.mxu0 0.0
    %2336 = vmatpush2.msra.mxu0 0.0
    %2337 = vmatprep.subr.mxu0 0.0
    %2338 = vmatpush2.msra.mxu0 0.0
    %2339 = vmatprep.subr.mxu0 0.0
    %2340 = vmatpush2.msra.mxu0 0.0
    %2341 = vmatprep.subr.mxu0 0.0
    %2342 = vmatpush2.msra.mxu0 0.0
    %2343 = vmatprep.subr.mxu0 0.0
    %2344 = vmatpush2.msra.mxu0 0.0
    %2345 = vmatprep.subr.mxu0 0.0
    %2346 = vmatpush2.msra.mxu0 0.0
    %2347 = vmatprep.subr.mxu0 0.0
    %2348 = vmatpush2.msra.mxu0 0.0
    %2349 = vmatprep.subr.mxu0 0.0
    %2350 = vmatpush2.msra.mxu0 0.0
    %2351 = vmatprep.subr.mxu0 0.0
    %2352 = vmatpush2.msra.mxu0 0.0
    %2353 = vmatprep.subr.mxu0 0.0
    %2354 = vmatpush2.msra.mxu0 0.0
    %2355 = vmatprep.subr.mxu0 0.0
    %2356 = vmatpush2.msra.mxu0 0.0
    %2357 = vmatprep.subr.mxu0 0.0
    %2358 = vmatpush2.msra.mxu0 0.0
    %2359 = vmatprep.mubr.f32.mxu0 0.0
    %2360 = vmatmul.mubr.f32.gmra.mxu0 %v2263
    %v2361 = vpop.f32.mrf.mxu0
    %v2362 = vadd.f32 0.0, %v2361
    %v2363 = vpop.f32.mrf.mxu0
    %v2364 = vadd.f32 0.0, %v2363
    %2365 = vmatprep.mubr.f32.mxu0 0.0
    %2366 = vmatmul.mubr.f32.gmra.mxu0 %v2265
    %v2367 = vpop.f32.mrf.mxu0
    %v2368 = vadd.f32 0.0, %v2367
    %v2369 = vpop.f32.mrf.mxu0
    %v2370 = vadd.f32 0.0, %v2369
    %2371 = vmatprep.mubr.f32.mxu0 0.0
    %2372 = vmatmul.mubr.f32.gmra.mxu0 %v2267
    %v2373 = vpop.f32.mrf.mxu0
    %v2374 = vadd.f32 0.0, %v2373
    %v2375 = vpop.f32.mrf.mxu0
    %v2376 = vadd.f32 0.0, %v2375
    %2377 = vmatprep.mubr.f32.mxu0 0.0
    %2378 = vmatmul.mubr.f32.gmra.mxu0 %v2269
    %v2379 = vpop.f32.mrf.mxu0
    %v2380 = vadd.f32 0.0, %v2379
    %v2381 = vpop.f32.mrf.mxu0
    %v2382 = vadd.f32 0.0, %v2381
    %2383 = vmatprep.mubr.f32.mxu0 0.0
    %2384 = vmatmul.mubr.f32.gmra.mxu0 %v2271
    %v2385 = vpop.f32.mrf.mxu0
    %v2386 = vadd.f32 0.0, %v2385
    %v2387 = vpop.f32.mrf.mxu0
    %v2388 = vadd.f32 0.0, %v2387
    %2389 = vmatprep.mubr.f32.mxu0 0.0
    %2390 = vmatmul.mubr.f32.gmra.mxu0 %v2273
    %v2391 = vpop.f32.mrf.mxu0
    %v2392 = vadd.f32 0.0, %v2391
    %v2393 = vpop.f32.mrf.mxu0
    %v2394 = vadd.f32 0.0, %v2393
    %2395 = vmatprep.mubr.f32.mxu0 0.0
    %2396 = vmatmul.mubr.f32.gmra.mxu0 %v2275
    %v2397 = vpop.f32.mrf.mxu0
    %v2398 = vadd.f32 0.0, %v2397
    %v2399 = vpop.f32.mrf.mxu0
    %v2400 = vadd.f32 0.0, %v2399
    %2401 = vmatprep.mubr.f32.mxu0 0.0
    %2402 = vmatmul.mubr.f32.gmra.mxu0 %v2277
    %v2403 = vpop.f32.mrf.mxu0
    %v2404 = vadd.f32 0.0, %v2403
    %v2405 = vpop.f32.mrf.mxu0
    %v2406 = vadd.f32 0.0, %v2405
    %2407 = vmatprep.mubr.f32.mxu0 0.0
    %2408 = vmatmul.mubr.f32.gmra.mxu0 %v2279
    %v2409 = vpop.f32.mrf.mxu0
    %v2410 = vadd.f32 0.0, %v2409
    %v2411 = vpop.f32.mrf.mxu0
    %v2412 = vadd.f32 0.0, %v2411
    %2413 = vmatprep.mubr.f32.mxu0 0.0
    %2414 = vmatmul.mubr.f32.gmra.mxu0 %v2281
    %v2415 = vpop.f32.mrf.mxu0
    %v2416 = vadd.f32 0.0, %v2415
    %v2417 = vpop.f32.mrf.mxu0
    %v2418 = vadd.f32 0.0, %v2417
    %2419 = vmatprep.mubr.f32.mxu0 0.0
    %2420 = vmatmul.mubr.f32.gmra.mxu0 %v2283
    %v2421 = vpop.f32.mrf.mxu0
    %v2422 = vadd.f32 0.0, %v2421
    %v2423 = vpop.f32.mrf.mxu0
    %v2424 = vadd.f32 0.0, %v2423
    %2425 = vmatprep.mubr.f32.mxu0 0.0
    %2426 = vmatmul.mubr.f32.gmra.mxu0 %v2285
    %v2427 = vpop.f32.mrf.mxu0
    %v2428 = vadd.f32 0.0, %v2427
    %v2429 = vpop.f32.mrf.mxu0
    %v2430 = vadd.f32 0.0, %v2429
    %2431 = vmatprep.mubr.f32.mxu0 0.0
    %2432 = vmatmul.mubr.f32.gmra.mxu0 %v2287
    %v2433 = vpop.f32.mrf.mxu0
    %v2434 = vadd.f32 0.0, %v2433
    %v2435 = vpop.f32.mrf.mxu0
    %v2436 = vadd.f32 0.0, %v2435
    %2437 = vmatprep.mubr.f32.mxu0 0.0
    %2438 = vmatmul.mubr.f32.gmra.mxu0 %v2289
    %v2439 = vpop.f32.mrf.mxu0
    %v2440 = vadd.f32 0.0, %v2439
    %v2441 = vpop.f32.mrf.mxu0
    %v2442 = vadd.f32 0.0, %v2441
    %2443 = vmatprep.mubr.f32.mxu0 0.0
    %2444 = vmatmul.mubr.f32.gmra.mxu0 %v2291
    %v2445 = vpop.f32.mrf.mxu0
    %v2446 = vadd.f32 0.0, %v2445
    %v2447 = vpop.f32.mrf.mxu0
    %v2448 = vadd.f32 0.0, %v2447
    %2449 = vmatprep.mubr.f32.mxu0 0.0
    %2450 = vmatmul.mubr.f32.gmra.mxu0 %v2293
    %v2451 = vpop.f32.mrf.mxu0
    %v2452 = vadd.f32 0.0, %v2451
    %v2453 = vpop.f32.mrf.mxu0
    %v2454 = vadd.f32 0.0, %v2453
    %2455 = vdwg.mxu0
    %v2456 = vmul.f32 %v33, %v2133
    %v2457 = vmul.f32 %v34, %v2135
    %v2458 = vmul.f32 %v35, %v2139
    %v2459 = vmul.f32 %v36, %v2141
    %v2460 = vmul.f32 %v37, %v2145
    %v2461 = vmul.f32 %v38, %v2147
    %v2462 = vmul.f32 %v39, %v2151
    %v2463 = vmul.f32 %v40, %v2153
    %v2464 = vmul.f32 %v41, %v2157
    %v2465 = vmul.f32 %v42, %v2159
    %v2466 = vmul.f32 %v43, %v2163
    %v2467 = vmul.f32 %v44, %v2165
    %v2468 = vmul.f32 %v45, %v2169
    %v2469 = vmul.f32 %v46, %v2171
    %v2470 = vmul.f32 %v47, %v2175
    %v2471 = vmul.f32 %v48, %v2177
    %v2472 = vmul.f32 %v49, %v2181
    %v2473 = vmul.f32 %v50, %v2183
    %v2474 = vmul.f32 %v51, %v2187
    %v2475 = vmul.f32 %v52, %v2189
    %v2476 = vmul.f32 %v53, %v2193
    %v2477 = vmul.f32 %v54, %v2195
    %v2478 = vmul.f32 %v55, %v2199
    %v2479 = vmul.f32 %v56, %v2201
    %v2480 = vmul.f32 %v57, %v2205
    %v2481 = vmul.f32 %v58, %v2207
    %v2482 = vmul.f32 %v59, %v2211
    %v2483 = vmul.f32 %v60, %v2213
    %v2484 = vmul.f32 %v61, %v2217
    %v2485 = vmul.f32 %v62, %v2219
    %v2486 = vmul.f32 %v63, %v2223
    %v2487 = vmul.f32 %v64, %v2225
    %v2488 = vmul.f32 %v2456, %v2362
    %v2489 = vmul.f32 %v2457, %v2364
    %v2490 = vmul.f32 %v2458, %v2368
    %v2491 = vmul.f32 %v2459, %v2370
    %v2492 = vmul.f32 %v2460, %v2374
    %v2493 = vmul.f32 %v2461, %v2376
    %v2494 = vmul.f32 %v2462, %v2380
    %v2495 = vmul.f32 %v2463, %v2382
    %v2496 = vmul.f32 %v2464, %v2386
    %v2497 = vmul.f32 %v2465, %v2388
    %v2498 = vmul.f32 %v2466, %v2392
    %v2499 = vmul.f32 %v2467, %v2394
    %v2500 = vmul.f32 %v2468, %v2398
    %v2501 = vmul.f32 %v2469, %v2400
    %v2502 = vmul.f32 %v2470, %v2404
    %v2503 = vmul.f32 %v2471, %v2406
    %v2504 = vmul.f32 %v2472, %v2410
    %v2505 = vmul.f32 %v2473, %v2412
    %v2506 = vmul.f32 %v2474, %v2416
    %v2507 = vmul.f32 %v2475, %v2418
    %v2508 = vmul.f32 %v2476, %v2422
    %v2509 = vmul.f32 %v2477, %v2424
    %v2510 = vmul.f32 %v2478, %v2428
    %v2511 = vmul.f32 %v2479, %v2430
    %v2512 = vmul.f32 %v2480, %v2434
    %v2513 = vmul.f32 %v2481, %v2436
    %v2514 = vmul.f32 %v2482, %v2440
    %v2515 = vmul.f32 %v2483, %v2442
    %v2516 = vmul.f32 %v2484, %v2446
    %v2517 = vmul.f32 %v2485, %v2448
    %v2518 = vmul.f32 %v2486, %v2452
    %v2519 = vmul.f32 %v2487, %v2454
    %2520 = vst [vmem:[#allocation2] sm:$0xff] %v2488
    %2521 = vst [vmem:[#allocation2 + $0x8] sm:$0xff] %v2489
    %2522 = vst [vmem:[#allocation2 + $0x10] sm:$0xff] %v2490
    %2523 = vst [vmem:[#allocation2 + $0x18] sm:$0xff] %v2491
    %2524 = vst [vmem:[#allocation2 + $0x20] sm:$0xff] %v2492
    %2525 = vst [vmem:[#allocation2 + $0x28] sm:$0xff] %v2493
    %2526 = vst [vmem:[#allocation2 + $0x30] sm:$0xff] %v2494
    %2527 = vst [vmem:[#allocation2 + $0x38] sm:$0xff] %v2495
    %2528 = vst [vmem:[#allocation2 + $0x40] sm:$0xff] %v2496
    %2529 = vst [vmem:[#allocation2 + $0x48] sm:$0xff] %v2497
    %2530 = vst [vmem:[#allocation2 + $0x50] sm:$0xff] %v2498
    %2531 = vst [vmem:[#allocation2 + $0x58] sm:$0xff] %v2499
    %2532 = vst [vmem:[#allocation2 + $0x60] sm:$0xff] %v2500
    %2533 = vst [vmem:[#allocation2 + $0x68] sm:$0xff] %v2501
    %2534 = vst [vmem:[#allocation2 + $0x70] sm:$0xff] %v2502
    %2535 = vst [vmem:[#allocation2 + $0x78] sm:$0xff] %v2503
    %2536 = vst [vmem:[#allocation2 + $0x80] sm:$0xff] %v2504
    %2537 = vst [vmem:[#allocation2 + $0x88] sm:$0xff] %v2505
    %2538 = vst [vmem:[#allocation2 + $0x90] sm:$0xff] %v2506
    %2539 = vst [vmem:[#allocation2 + $0x98] sm:$0xff] %v2507
    %2540 = vst [vmem:[#allocation2 + $0xa0] sm:$0xff] %v2508
    %2541 = vst [vmem:[#allocation2 + $0xa8] sm:$0xff] %v2509
    %2542 = vst [vmem:[#allocation2 + $0xb0] sm:$0xff] %v2510
    %2543 = vst [vmem:[#allocation2 + $0xb8] sm:$0xff] %v2511
    %2544 = vst [vmem:[#allocation2 + $0xc0] sm:$0xff] %v2512
    %2545 = vst [vmem:[#allocation2 + $0xc8] sm:$0xff] %v2513
    %2546 = vst [vmem:[#allocation2 + $0xd0] sm:$0xff] %v2514
    %2547 = vst [vmem:[#allocation2 + $0xd8] sm:$0xff] %v2515
    %2548 = vst [vmem:[#allocation2 + $0xe0] sm:$0xff] %v2516
    %2549 = vst [vmem:[#allocation2 + $0xe8] sm:$0xff] %v2517
    %2550 = vst [vmem:[#allocation2 + $0xf0] sm:$0xff] %v2518
    %2551 = vst [vmem:[#allocation2 + $0xf8] sm:$0xff] %v2519
    // Predicated region
    $region38: #{tpu_custom_call.1} parent=1 // pred_check
      _
    $region39: #{tpu_custom_call.1} parent=1 // pred_check_branch
      %2553 = sbr.rel (0) target = $region41
    $region40: #{tpu_custom_call.1} parent=1 // pred_region
      %s2555 = ssub.s32 4096, 4096
      %2556 = vsyncadd [#allocation3], %s2555
      %s2557 = sshll.u32 [#allocation2], 4
      %s2558 = int_to_ptr.vmem [resolvable:$true] %s2557
      %2563 = dma.vmem_to_hbm [thread:$0]  %s2558, 4096, %s9, [#allocation3], 256, 256, 16
    $region41: #{tpu_custom_call.1} parent=1 // pred_fallthru
      _
    // Predicated region
    $region42: #{tpu_custom_call.1} parent=1 // pred_check
      _
    $region43: #{tpu_custom_call.1} parent=1 // pred_check_branch
      %2565 = sbr.rel (0) target = $region45
    $region44: #{tpu_custom_call.1} parent=1 // pred_region
      %2566 = dma.done [#allocation3], 4096
    $region45: #{tpu_custom_call.1} parent=1 // pred_fallthru
      _
    %2567 = vsyncpa [#allocation3], 1

</llo_original>
